<compile_context>
chip_gen: v5e
topology: v5e:2x2
jax: 0.10.0
libtpu: 0.0.40
codegen_flags: <defaults>
</compile_context>

<pallas_src>
import functools

import jax
import jax.numpy as jnp
import numpy as np
from jax.experimental import pallas as pl
from jax.experimental.pallas import tpu as pltpu


def simplenet_kernel(x_full_ref, x_blk_ref, w1_ref, o_ref, *, min_k, n_real):
    x_all = x_full_ref[...]        # (Np, Dp) zero-padded inputs, resident across the grid
    x_blk = x_blk_ref[...]         # (TM, Dp) this step's row block
    w1 = w1_ref[...]               # (Hp, Dp) torch-layout linear1.weight, resident

    # --- linear1: features = x @ w1.T (f32 accumulation on the MXU) ---------------------
    dims_t = (((1,), (1,)), ((), ()))  # contract last dims (x @ w1.T)
    feats_all = jax.lax.dot_general(x_all, w1, dims_t,
                                    preferred_element_type=jnp.float32)   # (Np, Hp)
    feats_blk = jax.lax.dot_general(x_blk, w1, dims_t,
                                    preferred_element_type=jnp.float32)   # (TM, Hp)

    # --- pairwise SQUARED distances, block rows vs all rows ----------------- (TM, Np) ---
    sq_all = jnp.sum(feats_all * feats_all, axis=-1, keepdims=True)        # (Np, 1)
    sq_blk = jnp.sum(feats_blk * feats_blk, axis=-1, keepdims=True)        # (TM, 1)
    gram = jax.lax.dot_general(feats_blk, feats_all, dims_t,
                               preferred_element_type=jnp.float32)         # (TM, Np)
    d2 = jnp.maximum(sq_blk + jnp.transpose(sq_all) - 2.0 * gram, 0.0)

    # Mask the zero-padded columns so pad rows never become neighbours of anyone.
    big = jnp.float32(1e30)
    col_ids = jax.lax.broadcasted_iota(jnp.int32, d2.shape, 1)
    d2 = jnp.where(col_ids < n_real, d2, big)

    # --- (min_k+1)-th smallest squared distance per row (self included) ------------------
    # Iteratively knock out the current row minimum; one XLU lane-reduction + one VPU
    # select per iteration.  Exact fp ties are removed together (negligible for
    # continuous data; the reference/sort semantics differ only on exact ties).
    def knock_out_min(_, work):
        cur_min = jnp.min(work, axis=-1, keepdims=True)
        return jnp.where(work == cur_min, big, work)

    work = jax.lax.fori_loop(0, min_k, knock_out_min, d2)
    thresh2 = jnp.min(work, axis=-1, keepdims=True)                        # (TM, 1)
    # guard: >= min_k+1 coincident feature rows would give thresh == 0 (the torch
    # reference would produce NaN here).
    thresh2 = jnp.maximum(thresh2, jnp.float32(1e-30))

    # --- soft-kNN weights: relu(1 - d / d_thr); exact reciprocal (only TM elements) ------
    inv_thresh = 1.0 / jnp.sqrt(thresh2)                                   # (TM, 1)
    w = jnp.maximum(1.0 - jnp.sqrt(d2) * inv_thresh, 0.0)                  # (TM, Np); pad cols -> 0

    # --- weighted average of ORIGINAL inputs; normalize AFTER the matmul -----------------
    wsum = jnp.maximum(jnp.sum(w, axis=-1, keepdims=True), jnp.float32(1e-30))  # (TM, 1)
    out = jax.lax.dot_general(w.astype(x_all.dtype), x_all,
                              (((1,), (0,)), ((), ())),
                              preferred_element_type=jnp.float32)          # (TM, Dp)
    o_ref[...] = (out * (1.0 / wsum)).astype(o_ref.dtype)


def _round_up(v, m):
    return (v + m - 1) // m * m


def simplenet_forward(x, y, w1, *, min_k=20):
    """Pallas SimpleNet forward.  `y` is accepted for API fidelity but (as in the PyTorch
    module) never used."""
    del y
    N, D_in = x.shape
    H = w1.shape[0]
    assert N > min_k, "soft-kNN needs batch > min_k (torch version would index OOB)"

    # Pad feature dims and the batch (soft-kNN lane dim) to full 128-lane width:
    # lane-dense slabs, unmasked stores.  Pad rows are masked out of every threshold.
    n_pad = _round_up(N, 128)
    dp = _round_up(D_in, 128)
    hp = _round_up(H, 128)
    xp = jnp.pad(x, ((0, n_pad - N), (0, dp - D_in)))
    w1p = jnp.pad(w1, ((0, hp - H), (0, dp - D_in)))

    # Row block: biggest aligned block that keeps ~4 live (TM, Np) f32 slabs + resident
    # x/feats within scoped VMEM on all chips (v7x: 64 MiB physical; v5e/v6e can go 2x).
    tm = 256 if n_pad % 256 == 0 else 128
    grid = (n_pad // tm,)

    kernel = functools.partial(simplenet_kernel, min_k=min_k, n_real=N)
    out_p = pl.pallas_call(
        kernel,
        out_shape=jax.ShapeDtypeStruct((n_pad, dp), x.dtype),
        grid_spec=pltpu.PrefetchScalarGridSpec(
            num_scalar_prefetch=0,
            grid=grid,
            in_specs=[
                pl.BlockSpec((n_pad, dp), lambda i: (0, 0)),   # x: all rows, resident
                pl.BlockSpec((tm, dp), lambda i: (i, 0)),      # x: this step's row block
                pl.BlockSpec((hp, dp), lambda i: (0, 0)),      # linear1.weight, resident
            ],
            out_specs=pl.BlockSpec((tm, dp), lambda i: (i, 0)),
        ),
        # Row blocks are independent -> "parallel" lets v7x shard them across both
        # TensorCores; 32 MiB scoped VMEM is >= the default on every chip generation.
        compiler_params=pltpu.CompilerParams(
            dimension_semantics=("parallel",),
            vmem_limit_bytes=32 * 1024 * 1024,
        ),
    )(xp, xp, w1p)
    return out_p[:N, :D_in]


def simplenet_ref(x, w1, min_k):
    """Pure-JAX reference (sort-based k-th order statistic, difference-form distances)."""
    feats = x @ w1.T
    d2 = jnp.sum((feats[:, None, :] - feats[None, :, :]) ** 2, axis=-1)
    dist = jnp.sqrt(jnp.maximum(d2, 0.0))
    kth = jnp.sort(dist, axis=-1)[:, min_k]            # (min_k+1)-th smallest, self included
    w = jnp.maximum(1.0 - dist / kth[:, None], 0.0)
    wn = w / jnp.sum(w, axis=-1, keepdims=True)
    return wn @ x


if __name__ == "__main__":
    N, D_IN, H, MIN_K = 32, 16, 8, 20                  # batch must exceed min_k

    key = jax.random.PRNGKey(0)
    kx, ky, kw = jax.random.split(key, 3)
    x = jax.random.normal(kx, (N, D_IN), dtype=jnp.float32)
    y = jax.random.normal(ky, (N, D_IN), dtype=jnp.float32)   # unused by forward
    bound = 1.0 / np.sqrt(D_IN)                               # torch Linear default-ish init
    w1 = jax.random.uniform(kw, (H, D_IN), minval=-bound, maxval=bound,
                            dtype=jnp.float32)

    out = simplenet_forward(x, y, w1, min_k=MIN_K)
    out = jax.block_until_ready(out)

    ref = simplenet_ref(x, w1, MIN_K)
    assert out.shape == x.shape and out.dtype == x.dtype
    np.testing.assert_allclose(np.asarray(out), np.asarray(ref),
                               rtol=1e-3, atol=1e-3)
    print("KERNEL_OK")
</pallas_src>

<mosaic_0001>
module attributes {stable_mosaic.version = 11 : i64} {
  func.func @simplenet_kernel(%arg0: i32, %arg1: memref<128x128xf32, #tpu.memory_space<vmem>>, %arg2: memref<128x128xf32, #tpu.memory_space<vmem>>, %arg3: memref<128x128xf32, #tpu.memory_space<vmem>>, %arg4: memref<128x128xf32, #tpu.memory_space<vmem>>) attributes {dimension_semantics = [#tpu.dimension_semantics<parallel>], iteration_bounds = array<i64: 1>, scalar_prefetch = 0 : i64, scratch_operands = 0 : i64, tpu.core_type = #tpu.core_type<tc>, window_params = [{pipeline_mode = #tpu.pipeline_mode<synchronous>, transform_indices = @transform_0, window_bounds = array<i64: 128, 128>}, {transform_indices = @transform_1, window_bounds = array<i64: 128, 128>}, {pipeline_mode = #tpu.pipeline_mode<synchronous>, transform_indices = @transform_2, window_bounds = array<i64: 128, 128>}, {transform_indices = @transform_3, window_bounds = array<i64: 128, 128>}]} {
    %c0 = arith.constant 0 : index
    %c0_0 = arith.constant 0 : index
    %0 = vector.load %arg1[%c0, %c0_0] : memref<128x128xf32, #tpu.memory_space<vmem>>, vector<128x128xf32>
    %c0_1 = arith.constant 0 : index
    %c0_2 = arith.constant 0 : index
    %1 = vector.load %arg2[%c0_1, %c0_2] : memref<128x128xf32, #tpu.memory_space<vmem>>, vector<128x128xf32>
    %c0_3 = arith.constant 0 : index
    %c0_4 = arith.constant 0 : index
    %2 = vector.load %arg3[%c0_3, %c0_4] : memref<128x128xf32, #tpu.memory_space<vmem>>, vector<128x128xf32>
    %cst = arith.constant dense<0.000000e+00> : vector<128x128xf32>
    %3 = tpu.matmul %0, %2, %cst {dimension_numbers = #tpu.dot_dimension_numbers<[1], [1], [0], [0], [0, 0, 1, 0], [], []>} : vector<128x128xf32>, vector<128x128xf32>, vector<128x128xf32> -> vector<128x128xf32>
    %cst_5 = arith.constant dense<0.000000e+00> : vector<128x128xf32>
    %4 = tpu.matmul %1, %2, %cst_5 {dimension_numbers = #tpu.dot_dimension_numbers<[1], [1], [0], [0], [0, 0, 1, 0], [], []>} : vector<128x128xf32>, vector<128x128xf32>, vector<128x128xf32> -> vector<128x128xf32>
    %5 = arith.mulf %3, %3 : vector<128x128xf32>
    %cst_6 = arith.constant dense<0.000000e+00> : vector<128xf32>
    %6 = vector.multi_reduction <add>, %5, %cst_6 [1] : vector<128x128xf32> to vector<128xf32>
    %7 = vector.shape_cast %6 : vector<128xf32> to vector<128x1xf32>
    %8 = arith.mulf %4, %4 : vector<128x128xf32>
    %cst_7 = arith.constant dense<0.000000e+00> : vector<128xf32>
    %9 = vector.multi_reduction <add>, %8, %cst_7 [1] : vector<128x128xf32> to vector<128xf32>
    %10 = vector.shape_cast %9 : vector<128xf32> to vector<128x1xf32>
    %cst_8 = arith.constant dense<0.000000e+00> : vector<128x128xf32>
    %11 = tpu.matmul %4, %3, %cst_8 {dimension_numbers = #tpu.dot_dimension_numbers<[1], [1], [0], [0], [0, 0, 1, 0], [], []>} : vector<128x128xf32>, vector<128x128xf32>, vector<128x128xf32> -> vector<128x128xf32>
    %12 = tpu.transpose %7, [1, 0] : vector<128x1xf32> -> vector<1x128xf32>
    %13 = vector.broadcast %10 : vector<128x1xf32> to vector<128x128xf32>
    %14 = vector.broadcast %12 : vector<1x128xf32> to vector<128x128xf32>
    %15 = arith.addf %13, %14 : vector<128x128xf32>
    %cst_9 = arith.constant 2.000000e+00 : f32
    %16 = vector.broadcast %cst_9 : f32 to vector<128x128xf32>
    %17 = arith.mulf %16, %11 : vector<128x128xf32>
    %18 = arith.subf %15, %17 : vector<128x128xf32>
    %cst_10 = arith.constant 0.000000e+00 : f32
    %19 = vector.broadcast %cst_10 : f32 to vector<128x128xf32>
    %20 = arith.maximumf %18, %19 : vector<128x128xf32>
    %21 = tpu.iota {dimensions = array<i32: 1>} : vector<128x128xi32>
    %c32_i32 = arith.constant 32 : i32
    %22 = vector.broadcast %c32_i32 : i32 to vector<128x128xi32>
    %23 = arith.cmpi slt, %21, %22 : vector<128x128xi32>
    %cst_11 = arith.constant 1.000000e+30 : f32
    %24 = vector.broadcast %cst_11 : f32 to vector<128x128xf32>
    %25 = arith.select %23, %20, %24 : vector<128x128xi1>, vector<128x128xf32>
    %cst_12 = arith.constant 1.000000e+30 : f32
    %c0_i32 = arith.constant 0 : i32
    %c20_i32 = arith.constant 20 : i32
    %26 = arith.addi %c0_i32, %c20_i32 : i32
    %c1_i32 = arith.constant 1 : i32
    %27 = scf.for %arg5 = %c0_i32 to %26 step %c1_i32 iter_args(%arg6 = %25) -> (vector<128x128xf32>)  : i32 {
      %cst_24 = arith.constant dense<0x7F800000> : vector<128xf32>
      %52 = vector.multi_reduction <minimumf>, %arg6, %cst_24 [1] : vector<128x128xf32> to vector<128xf32>
      %53 = vector.shape_cast %52 : vector<128xf32> to vector<128x1xf32>
      %54 = vector.broadcast %53 : vector<128x1xf32> to vector<128x128xf32>
      %55 = arith.cmpf oeq, %arg6, %54 : vector<128x128xf32>
      %56 = vector.broadcast %cst_12 : f32 to vector<128x128xf32>
      %57 = arith.select %55, %56, %arg6 : vector<128x128xi1>, vector<128x128xf32>
      scf.yield %57 : vector<128x128xf32>
    }
    %cst_13 = arith.constant dense<0x7F800000> : vector<128xf32>
    %28 = vector.multi_reduction <minimumf>, %27, %cst_13 [1] : vector<128x128xf32> to vector<128xf32>
    %29 = vector.shape_cast %28 : vector<128xf32> to vector<128x1xf32>
    %cst_14 = arith.constant 1.000000e-30 : f32
    %30 = vector.broadcast %cst_14 : f32 to vector<128x1xf32>
    %31 = arith.maximumf %29, %30 : vector<128x1xf32>
    %32 = math.sqrt %31 : vector<128x1xf32>
    %cst_15 = arith.constant 1.000000e+00 : f32
    %33 = vector.broadcast %cst_15 : f32 to vector<128x1xf32>
    %34 = arith.divf %33, %32 : vector<128x1xf32>
    %35 = math.sqrt %25 : vector<128x128xf32>
    %36 = vector.broadcast %34 : vector<128x1xf32> to vector<128x128xf32>
    %37 = arith.mulf %35, %36 : vector<128x128xf32>
    %cst_16 = arith.constant 1.000000e+00 : f32
    %38 = vector.broadcast %cst_16 : f32 to vector<128x128xf32>
    %39 = arith.subf %38, %37 : vector<128x128xf32>
    %cst_17 = arith.constant 0.000000e+00 : f32
    %40 = vector.broadcast %cst_17 : f32 to vector<128x128xf32>
    %41 = arith.maximumf %39, %40 : vector<128x128xf32>
    %cst_18 = arith.constant dense<0.000000e+00> : vector<128xf32>
    %42 = vector.multi_reduction <add>, %41, %cst_18 [1] : vector<128x128xf32> to vector<128xf32>
    %43 = vector.shape_cast %42 : vector<128xf32> to vector<128x1xf32>
    %cst_19 = arith.constant 1.000000e-30 : f32
    %44 = vector.broadcast %cst_19 : f32 to vector<128x1xf32>
    %45 = arith.maximumf %43, %44 : vector<128x1xf32>
    %cst_20 = arith.constant dense<0.000000e+00> : vector<128x128xf32>
    %46 = tpu.matmul %41, %0, %cst_20 {dimension_numbers = #tpu.dot_dimension_numbers<[1], [0], [0], [1], [0, 0, 1, 1], [], []>} : vector<128x128xf32>, vector<128x128xf32>, vector<128x128xf32> -> vector<128x128xf32>
    %cst_21 = arith.constant 1.000000e+00 : f32
    %47 = vector.broadcast %cst_21 : f32 to vector<128x1xf32>
    %48 = arith.divf %47, %45 : vector<128x1xf32>
    %49 = vector.broadcast %48 : vector<128x1xf32> to vector<128x128xf32>
    %50 = arith.mulf %46, %49 : vector<128x128xf32>
    %c0_22 = arith.constant 0 : index
    %c0_23 = arith.constant 0 : index
    %51 = vector.load %arg4[%c0_22, %c0_23] : memref<128x128xf32, #tpu.memory_space<vmem>>, vector<128x128xf32>
    tpu.vector_store %arg4[%c0_22, %c0_23], %50 {strides = array<i32>} : memref<128x128xf32, #tpu.memory_space<vmem>>, vector<128x128xf32>,
    return
  }
  func.func @transform_0(%arg0: i32) -> (i32, i32) {
    %c0_i32 = arith.constant 0 : i32
    %c0_i32_0 = arith.constant 0 : i32
    %c0_i32_1 = arith.constant 0 : i32
    return %c0_i32, %c0_i32_0 : i32, i32
  }
  func.func @transform_1(%arg0: i32) -> (i32, i32) {
    %c0_i32 = arith.constant 0 : i32
    %c0_i32_0 = arith.constant 0 : i32
    return %arg0, %c0_i32 : i32, i32
  }
  func.func @transform_2(%arg0: i32) -> (i32, i32) {
    %c0_i32 = arith.constant 0 : i32
    %c0_i32_0 = arith.constant 0 : i32
    %c0_i32_1 = arith.constant 0 : i32
    return %c0_i32, %c0_i32_0 : i32, i32
  }
  func.func @transform_3(%arg0: i32) -> (i32, i32) {
    %c0_i32 = arith.constant 0 : i32
    %c0_i32_0 = arith.constant 0 : i32
    return %arg0, %c0_i32 : i32, i32
  }
}

</mosaic_0001>

<llo_original>
// kernel: tpu_custom_call.1
$region0: #{tpu_custom_call.1}
  #allocation0 [shape = 'u32[]', space=smem, size = 0x4, offset = 0x4, fixed_abs, tag = 'smem constant byte address 0x4 - core index']
  #allocation1 [shape = 'u32[72,128]{1,0:T(1,128)}', space=vmem, size = 0x9000, scoped, tag = 'internal scratch']
  %s0 = inlined_call_operand.hbm [shape: f32[128,128], index: 0, kind: input, shape index: {}]
  %s1 = inlined_call_operand.hbm [shape: f32[128,128], index: 1, kind: input, shape index: {}]
  %s2 = inlined_call_operand.hbm [shape: f32[128,128], index: 2, kind: input, shape index: {}]
  %s3 = inlined_call_operand.hbm [shape: f32[128,128], index: 3, kind: output, shape index: {}]
  %s4 = sld [smem:[#allocation0]]
  $region41: #{tpu_custom_call.1} parent=0
    _
  %s6 = ssub.s32 1, %s4
  %s7 = scalar_select 0, %s6, %s4
  $region1: #{tpu_custom_call.1} parent=0
    #allocation2 [shape = 'u8[65536]{0}', space=vmem, size = 0x10000, scoped, tag = 'input window, operand 0, single buffered']
    #allocation3 [shape = 's32[1]{0}', space=sflag, size = 0x4, scoped, tag = 'scoped memory for tpu_custom_call.1']
    #allocation4 [shape = 's32[1]{0}', space=sflag, size = 0x4, scoped, tag = 'scoped memory for tpu_custom_call.1']
    #allocation5 [shape = 'u8[65536]{0}', space=vmem, size = 0x10000, scoped, tag = 'input window, operand 1, single buffered']
    #allocation6 [shape = 's32[1]{0}', space=sflag, size = 0x4, scoped, tag = 'scoped memory for tpu_custom_call.1']
    #allocation7 [shape = 'u8[65536]{0}', space=vmem, size = 0x10000, scoped, tag = 'input window, operand 2, single buffered']
    #allocation8 [shape = 'u8[65536]{0}', space=vmem, size = 0x10000, scoped, tag = 'output window, operand 0, single buffered']
    %8 = vsyncpa [#allocation3], 0
    %9 = vsyncpa [#allocation6], 0
    %10 = vsyncpa [#allocation4], 0
    // Predicated region
    $region2: #{tpu_custom_call.1} parent=1 // pred_check
      _
    $region3: #{tpu_custom_call.1} parent=1 // pred_check_branch
      %12 = sbr.rel (0) target = $region5
    $region4: #{tpu_custom_call.1} parent=1 // pred_region
      %14 = vsyncadd [#allocation3], 0
      %s15 = sshll.u32 %s0, 4
      %s16 = int_to_ptr.hbm [resolvable:$true] %s15
      %s17 = sshll.u32 [#allocation2], 4
      %s18 = int_to_ptr.vmem [resolvable:$true] %s17
      %23 = dma.hbm_to_vmem [thread:$0]  %s16, 2048, %s18, [#allocation3], 128, 128, 8
    $region5: #{tpu_custom_call.1} parent=1 // pred_fallthru
      _
    // Predicated region
    $region6: #{tpu_custom_call.1} parent=1 // pred_check
      _
    $region7: #{tpu_custom_call.1} parent=1 // pred_check_branch
      %25 = sbr.rel (0) target = $region9
    $region8: #{tpu_custom_call.1} parent=1 // pred_region
      %27 = vsyncadd [#allocation6], 0
      %s28 = sshll.u32 %s1, 4
      %s29 = int_to_ptr.hbm [resolvable:$true] %s28
      %s30 = sshll.u32 [#allocation5], 4
      %s31 = int_to_ptr.vmem [resolvable:$true] %s30
      %36 = dma.hbm_to_vmem [thread:$0]  %s29, 2048, %s31, [#allocation6], 128, 128, 8
    $region9: #{tpu_custom_call.1} parent=1 // pred_fallthru
      _
    // Predicated region
    $region10: #{tpu_custom_call.1} parent=1 // pred_check
      _
    $region11: #{tpu_custom_call.1} parent=1 // pred_check_branch
      %38 = sbr.rel (0) target = $region13
    $region12: #{tpu_custom_call.1} parent=1 // pred_region
      %40 = vsyncadd [#allocation6], 0
      %s41 = sshll.u32 %s2, 4
      %s42 = int_to_ptr.hbm [resolvable:$true] %s41
      %s43 = sshll.u32 [#allocation7], 4
      %s44 = int_to_ptr.vmem [resolvable:$true] %s43
      %49 = dma.hbm_to_vmem [thread:$0]  %s42, 2048, %s44, [#allocation6], 128, 128, 8
    $region13: #{tpu_custom_call.1} parent=1 // pred_fallthru
      _
    // Predicated region
    $region14: #{tpu_custom_call.1} parent=1 // pred_check
      _
    $region15: #{tpu_custom_call.1} parent=1 // pred_check_branch
      %51 = sbr.rel (0) target = $region17
    $region16: #{tpu_custom_call.1} parent=1 // pred_region
      %53 = dma.done [#allocation3], 2048
    $region17: #{tpu_custom_call.1} parent=1 // pred_fallthru
      _
    // Predicated region
    $region18: #{tpu_custom_call.1} parent=1 // pred_check
      _
    $region19: #{tpu_custom_call.1} parent=1 // pred_check_branch
      %55 = sbr.rel (0) target = $region21
    $region20: #{tpu_custom_call.1} parent=1 // pred_region
      %57 = dma.done [#allocation6], 2048
    $region21: #{tpu_custom_call.1} parent=1 // pred_fallthru
      _
    // Predicated region
    $region22: #{tpu_custom_call.1} parent=1 // pred_check
      _
    $region23: #{tpu_custom_call.1} parent=1 // pred_check_branch
      %59 = sbr.rel (0) target = $region25
    $region24: #{tpu_custom_call.1} parent=1 // pred_region
      %61 = dma.done [#allocation6], 2048
    $region25: #{tpu_custom_call.1} parent=1 // pred_fallthru
      _
    %v62 = vld [vmem:[#allocation2] sm:$0xff]
    %v63 = vld [vmem:[#allocation2 + $0x8] sm:$0xff]
    %v64 = vld [vmem:[#allocation2 + $0x10] sm:$0xff]
    %v65 = vld [vmem:[#allocation2 + $0x18] sm:$0xff]
    %v66 = vld [vmem:[#allocation2 + $0x20] sm:$0xff]
    %v67 = vld [vmem:[#allocation2 + $0x28] sm:$0xff]
    %v68 = vld [vmem:[#allocation2 + $0x30] sm:$0xff]
    %v69 = vld [vmem:[#allocation2 + $0x38] sm:$0xff]
    %v70 = vld [vmem:[#allocation2 + $0x40] sm:$0xff]
    %v71 = vld [vmem:[#allocation2 + $0x48] sm:$0xff]
    %v72 = vld [vmem:[#allocation2 + $0x50] sm:$0xff]
    %v73 = vld [vmem:[#allocation2 + $0x58] sm:$0xff]
    %v74 = vld [vmem:[#allocation2 + $0x60] sm:$0xff]
    %v75 = vld [vmem:[#allocation2 + $0x68] sm:$0xff]
    %v76 = vld [vmem:[#allocation2 + $0x70] sm:$0xff]
    %v77 = vld [vmem:[#allocation2 + $0x78] sm:$0xff]
    %v78 = vld [vmem:[#allocation5] sm:$0xff]
    %v79 = vld [vmem:[#allocation5 + $0x8] sm:$0xff]
    %v80 = vld [vmem:[#allocation5 + $0x10] sm:$0xff]
    %v81 = vld [vmem:[#allocation5 + $0x18] sm:$0xff]
    %v82 = vld [vmem:[#allocation5 + $0x20] sm:$0xff]
    %v83 = vld [vmem:[#allocation5 + $0x28] sm:$0xff]
    %v84 = vld [vmem:[#allocation5 + $0x30] sm:$0xff]
    %v85 = vld [vmem:[#allocation5 + $0x38] sm:$0xff]
    %v86 = vld [vmem:[#allocation5 + $0x40] sm:$0xff]
    %v87 = vld [vmem:[#allocation5 + $0x48] sm:$0xff]
    %v88 = vld [vmem:[#allocation5 + $0x50] sm:$0xff]
    %v89 = vld [vmem:[#allocation5 + $0x58] sm:$0xff]
    %v90 = vld [vmem:[#allocation5 + $0x60] sm:$0xff]
    %v91 = vld [vmem:[#allocation5 + $0x68] sm:$0xff]
    %v92 = vld [vmem:[#allocation5 + $0x70] sm:$0xff]
    %v93 = vld [vmem:[#allocation5 + $0x78] sm:$0xff]
    %v94 = vld [vmem:[#allocation7] sm:$0xff]
    %v95 = vld [vmem:[#allocation7 + $0x8] sm:$0xff]
    %v96 = vld [vmem:[#allocation7 + $0x10] sm:$0xff]
    %v97 = vld [vmem:[#allocation7 + $0x18] sm:$0xff]
    %v98 = vld [vmem:[#allocation7 + $0x20] sm:$0xff]
    %v99 = vld [vmem:[#allocation7 + $0x28] sm:$0xff]
    %v100 = vld [vmem:[#allocation7 + $0x30] sm:$0xff]
    %v101 = vld [vmem:[#allocation7 + $0x38] sm:$0xff]
    %v102 = vld [vmem:[#allocation7 + $0x40] sm:$0xff]
    %v103 = vld [vmem:[#allocation7 + $0x48] sm:$0xff]
    %v104 = vld [vmem:[#allocation7 + $0x50] sm:$0xff]
    %v105 = vld [vmem:[#allocation7 + $0x58] sm:$0xff]
    %v106 = vld [vmem:[#allocation7 + $0x60] sm:$0xff]
    %v107 = vld [vmem:[#allocation7 + $0x68] sm:$0xff]
    %v108 = vld [vmem:[#allocation7 + $0x70] sm:$0xff]
    %v109 = vld [vmem:[#allocation7 + $0x78] sm:$0xff]
    %110 = vmatpush.xpose.msra.mxu0 %v109
    %111 = vmatpush.xpose.msra.mxu0 %v108
    %112 = vmatpush.xpose.msra.mxu0 %v107
    %113 = vmatpush.xpose.msra.mxu0 %v106
    %114 = vmatpush.xpose.msra.mxu0 %v105
    %115 = vmatpush.xpose.msra.mxu0 %v104
    %116 = vmatpush.xpose.msra.mxu0 %v103
    %117 = vmatpush.xpose.msra.mxu0 %v102
    %118 = vmatpush.xpose.msra.mxu0 %v101
    %119 = vmatpush.xpose.msra.mxu0 %v100
    %120 = vmatpush.xpose.msra.mxu0 %v99
    %121 = vmatpush.xpose.msra.mxu0 %v98
    %122 = vmatpush.xpose.msra.mxu0 %v97
    %123 = vmatpush.xpose.msra.mxu0 %v96
    %124 = vmatpush.xpose.msra.mxu0 %v95
    %125 = vmatpush.xpose.msra.mxu0 %v94
    %126 = vmatmul.f32.gmra.mxu0 %v62
    %v127 = vpop.f32.mrf.mxu0
    %v128 = vadd.f32 0.0, %v127
    %129 = vmatmul.f32.gmra.mxu0 %v63
    %v130 = vpop.f32.mrf.mxu0
    %v131 = vadd.f32 0.0, %v130
    %132 = vmatmul.f32.gmra.mxu0 %v64
    %v133 = vpop.f32.mrf.mxu0
    %v134 = vadd.f32 0.0, %v133
    %135 = vmatmul.f32.gmra.mxu0 %v65
    %v136 = vpop.f32.mrf.mxu0
    %v137 = vadd.f32 0.0, %v136
    %138 = vmatmul.f32.gmra.mxu0 %v66
    %v139 = vpop.f32.mrf.mxu0
    %v140 = vadd.f32 0.0, %v139
    %141 = vmatmul.f32.gmra.mxu0 %v67
    %v142 = vpop.f32.mrf.mxu0
    %v143 = vadd.f32 0.0, %v142
    %144 = vmatmul.f32.gmra.mxu0 %v68
    %v145 = vpop.f32.mrf.mxu0
    %v146 = vadd.f32 0.0, %v145
    %147 = vmatmul.f32.gmra.mxu0 %v69
    %v148 = vpop.f32.mrf.mxu0
    %v149 = vadd.f32 0.0, %v148
    %150 = vmatmul.f32.gmra.mxu0 %v70
    %v151 = vpop.f32.mrf.mxu0
    %v152 = vadd.f32 0.0, %v151
    %153 = vmatmul.f32.gmra.mxu0 %v71
    %v154 = vpop.f32.mrf.mxu0
    %v155 = vadd.f32 0.0, %v154
    %156 = vmatmul.f32.gmra.mxu0 %v72
    %v157 = vpop.f32.mrf.mxu0
    %v158 = vadd.f32 0.0, %v157
    %159 = vmatmul.f32.gmra.mxu0 %v73
    %v160 = vpop.f32.mrf.mxu0
    %v161 = vadd.f32 0.0, %v160
    %162 = vmatmul.f32.gmra.mxu0 %v74
    %v163 = vpop.f32.mrf.mxu0
    %v164 = vadd.f32 0.0, %v163
    %165 = vmatmul.f32.gmra.mxu0 %v75
    %v166 = vpop.f32.mrf.mxu0
    %v167 = vadd.f32 0.0, %v166
    %168 = vmatmul.f32.gmra.mxu0 %v76
    %v169 = vpop.f32.mrf.mxu0
    %v170 = vadd.f32 0.0, %v169
    %171 = vmatmul.f32.gmra.mxu0 %v77
    %v172 = vpop.f32.mrf.mxu0
    %v173 = vadd.f32 0.0, %v172
    %174 = vdwg.mxu0
    %175 = vmatpush.xpose.msra.mxu0 %v109
    %176 = vmatpush.xpose.msra.mxu0 %v108
    %177 = vmatpush.xpose.msra.mxu0 %v107
    %178 = vmatpush.xpose.msra.mxu0 %v106
    %179 = vmatpush.xpose.msra.mxu0 %v105
    %180 = vmatpush.xpose.msra.mxu0 %v104
    %181 = vmatpush.xpose.msra.mxu0 %v103
    %182 = vmatpush.xpose.msra.mxu0 %v102
    %183 = vmatpush.xpose.msra.mxu0 %v101
    %184 = vmatpush.xpose.msra.mxu0 %v100
    %185 = vmatpush.xpose.msra.mxu0 %v99
    %186 = vmatpush.xpose.msra.mxu0 %v98
    %187 = vmatpush.xpose.msra.mxu0 %v97
    %188 = vmatpush.xpose.msra.mxu0 %v96
    %189 = vmatpush.xpose.msra.mxu0 %v95
    %190 = vmatpush.xpose.msra.mxu0 %v94
    %191 = vmatmul.f32.gmra.mxu0 %v78
    %v192 = vpop.f32.mrf.mxu0
    %v193 = vadd.f32 0.0, %v192
    %194 = vmatmul.f32.gmra.mxu0 %v79
    %v195 = vpop.f32.mrf.mxu0
    %v196 = vadd.f32 0.0, %v195
    %197 = vmatmul.f32.gmra.mxu0 %v80
    %v198 = vpop.f32.mrf.mxu0
    %v199 = vadd.f32 0.0, %v198
    %200 = vmatmul.f32.gmra.mxu0 %v81
    %v201 = vpop.f32.mrf.mxu0
    %v202 = vadd.f32 0.0, %v201
    %203 = vmatmul.f32.gmra.mxu0 %v82
    %v204 = vpop.f32.mrf.mxu0
    %v205 = vadd.f32 0.0, %v204
    %206 = vmatmul.f32.gmra.mxu0 %v83
    %v207 = vpop.f32.mrf.mxu0
    %v208 = vadd.f32 0.0, %v207
    %209 = vmatmul.f32.gmra.mxu0 %v84
    %v210 = vpop.f32.mrf.mxu0
    %v211 = vadd.f32 0.0, %v210
    %212 = vmatmul.f32.gmra.mxu0 %v85
    %v213 = vpop.f32.mrf.mxu0
    %v214 = vadd.f32 0.0, %v213
    %215 = vmatmul.f32.gmra.mxu0 %v86
    %v216 = vpop.f32.mrf.mxu0
    %v217 = vadd.f32 0.0, %v216
    %218 = vmatmul.f32.gmra.mxu0 %v87
    %v219 = vpop.f32.mrf.mxu0
    %v220 = vadd.f32 0.0, %v219
    %221 = vmatmul.f32.gmra.mxu0 %v88
    %v222 = vpop.f32.mrf.mxu0
    %v223 = vadd.f32 0.0, %v222
    %224 = vmatmul.f32.gmra.mxu0 %v89
    %v225 = vpop.f32.mrf.mxu0
    %v226 = vadd.f32 0.0, %v225
    %227 = vmatmul.f32.gmra.mxu0 %v90
    %v228 = vpop.f32.mrf.mxu0
    %v229 = vadd.f32 0.0, %v228
    %230 = vmatmul.f32.gmra.mxu0 %v91
    %v231 = vpop.f32.mrf.mxu0
    %v232 = vadd.f32 0.0, %v231
    %233 = vmatmul.f32.gmra.mxu0 %v92
    %v234 = vpop.f32.mrf.mxu0
    %v235 = vadd.f32 0.0, %v234
    %236 = vmatmul.f32.gmra.mxu0 %v93
    %v237 = vpop.f32.mrf.mxu0
    %v238 = vadd.f32 0.0, %v237
    %239 = vdwg.mxu0
    %v240 = vmul.f32 %v128, %v128
    %v241 = vmul.f32 %v131, %v131
    %v242 = vmul.f32 %v134, %v134
    %v243 = vmul.f32 %v137, %v137
    %v244 = vmul.f32 %v140, %v140
    %v245 = vmul.f32 %v143, %v143
    %v246 = vmul.f32 %v146, %v146
    %v247 = vmul.f32 %v149, %v149
    %v248 = vmul.f32 %v152, %v152
    %v249 = vmul.f32 %v155, %v155
    %v250 = vmul.f32 %v158, %v158
    %v251 = vmul.f32 %v161, %v161
    %v252 = vmul.f32 %v164, %v164
    %v253 = vmul.f32 %v167, %v167
    %v254 = vmul.f32 %v170, %v170
    %v255 = vmul.f32 %v173, %v173
    %256 = vadd.xlane.f32.xlu0 %v240
    %v257 = vpop.xlane.xlu0 %256
    %258 = vadd.xlane.f32.xlu0 %v241
    %v259 = vpop.xlane.xlu0 %258
    %260 = vadd.xlane.f32.xlu0 %v242
    %v261 = vpop.xlane.xlu0 %260
    %262 = vadd.xlane.f32.xlu0 %v243
    %v263 = vpop.xlane.xlu0 %262
    %264 = vadd.xlane.f32.xlu0 %v244
    %v265 = vpop.xlane.xlu0 %264
    %266 = vadd.xlane.f32.xlu0 %v245
    %v267 = vpop.xlane.xlu0 %266
    %268 = vadd.xlane.f32.xlu0 %v246
    %v269 = vpop.xlane.xlu0 %268
    %270 = vadd.xlane.f32.xlu0 %v247
    %v271 = vpop.xlane.xlu0 %270
    %272 = vadd.xlane.f32.xlu0 %v248
    %v273 = vpop.xlane.xlu0 %272
    %274 = vadd.xlane.f32.xlu0 %v249
    %v275 = vpop.xlane.xlu0 %274
    %276 = vadd.xlane.f32.xlu0 %v250
    %v277 = vpop.xlane.xlu0 %276
    %278 = vadd.xlane.f32.xlu0 %v251
    %v279 = vpop.xlane.xlu0 %278
    %280 = vadd.xlane.f32.xlu0 %v252
    %v281 = vpop.xlane.xlu0 %280
    %282 = vadd.xlane.f32.xlu0 %v253
    %v283 = vpop.xlane.xlu0 %282
    %284 = vadd.xlane.f32.xlu0 %v254
    %v285 = vpop.xlane.xlu0 %284
    %286 = vadd.xlane.f32.xlu0 %v255
    %v287 = vpop.xlane.xlu0 %286
    %v288 = vmul.f32 %v193, %v193
    %v289 = vmul.f32 %v196, %v196
    %v290 = vmul.f32 %v199, %v199
    %v291 = vmul.f32 %v202, %v202
    %v292 = vmul.f32 %v205, %v205
    %v293 = vmul.f32 %v208, %v208
    %v294 = vmul.f32 %v211, %v211
    %v295 = vmul.f32 %v214, %v214
    %v296 = vmul.f32 %v217, %v217
    %v297 = vmul.f32 %v220, %v220
    %v298 = vmul.f32 %v223, %v223
    %v299 = vmul.f32 %v226, %v226
    %v300 = vmul.f32 %v229, %v229
    %v301 = vmul.f32 %v232, %v232
    %v302 = vmul.f32 %v235, %v235
    %v303 = vmul.f32 %v238, %v238
    %304 = vadd.xlane.f32.xlu0 %v288
    %v305 = vpop.xlane.xlu0 %304
    %306 = vadd.xlane.f32.xlu0 %v289
    %v307 = vpop.xlane.xlu0 %306
    %308 = vadd.xlane.f32.xlu0 %v290
    %v309 = vpop.xlane.xlu0 %308
    %310 = vadd.xlane.f32.xlu0 %v291
    %v311 = vpop.xlane.xlu0 %310
    %312 = vadd.xlane.f32.xlu0 %v292
    %v313 = vpop.xlane.xlu0 %312
    %314 = vadd.xlane.f32.xlu0 %v293
    %v315 = vpop.xlane.xlu0 %314
    %316 = vadd.xlane.f32.xlu0 %v294
    %v317 = vpop.xlane.xlu0 %316
    %318 = vadd.xlane.f32.xlu0 %v295
    %v319 = vpop.xlane.xlu0 %318
    %320 = vadd.xlane.f32.xlu0 %v296
    %v321 = vpop.xlane.xlu0 %320
    %322 = vadd.xlane.f32.xlu0 %v297
    %v323 = vpop.xlane.xlu0 %322
    %324 = vadd.xlane.f32.xlu0 %v298
    %v325 = vpop.xlane.xlu0 %324
    %326 = vadd.xlane.f32.xlu0 %v299
    %v327 = vpop.xlane.xlu0 %326
    %328 = vadd.xlane.f32.xlu0 %v300
    %v329 = vpop.xlane.xlu0 %328
    %330 = vadd.xlane.f32.xlu0 %v301
    %v331 = vpop.xlane.xlu0 %330
    %332 = vadd.xlane.f32.xlu0 %v302
    %v333 = vpop.xlane.xlu0 %332
    %334 = vadd.xlane.f32.xlu0 %v303
    %v335 = vpop.xlane.xlu0 %334
    %336 = vmatpush.xpose.msra.mxu0 %v173
    %337 = vmatpush.xpose.msra.mxu0 %v170
    %338 = vmatpush.xpose.msra.mxu0 %v167
    %339 = vmatpush.xpose.msra.mxu0 %v164
    %340 = vmatpush.xpose.msra.mxu0 %v161
    %341 = vmatpush.xpose.msra.mxu0 %v158
    %342 = vmatpush.xpose.msra.mxu0 %v155
    %343 = vmatpush.xpose.msra.mxu0 %v152
    %344 = vmatpush.xpose.msra.mxu0 %v149
    %345 = vmatpush.xpose.msra.mxu0 %v146
    %346 = vmatpush.xpose.msra.mxu0 %v143
    %347 = vmatpush.xpose.msra.mxu0 %v140
    %348 = vmatpush.xpose.msra.mxu0 %v137
    %349 = vmatpush.xpose.msra.mxu0 %v134
    %350 = vmatpush.xpose.msra.mxu0 %v131
    %351 = vmatpush.xpose.msra.mxu0 %v128
    %352 = vmatmul.f32.gmra.mxu0 %v193
    %v353 = vpop.f32.mrf.mxu0
    %v354 = vadd.f32 0.0, %v353
    %355 = vmatmul.f32.gmra.mxu0 %v196
    %v356 = vpop.f32.mrf.mxu0
    %v357 = vadd.f32 0.0, %v356
    %358 = vmatmul.f32.gmra.mxu0 %v199
    %v359 = vpop.f32.mrf.mxu0
    %v360 = vadd.f32 0.0, %v359
    %361 = vmatmul.f32.gmra.mxu0 %v202
    %v362 = vpop.f32.mrf.mxu0
    %v363 = vadd.f32 0.0, %v362
    %364 = vmatmul.f32.gmra.mxu0 %v205
    %v365 = vpop.f32.mrf.mxu0
    %v366 = vadd.f32 0.0, %v365
    %367 = vmatmul.f32.gmra.mxu0 %v208
    %v368 = vpop.f32.mrf.mxu0
    %v369 = vadd.f32 0.0, %v368
    %370 = vmatmul.f32.gmra.mxu0 %v211
    %v371 = vpop.f32.mrf.mxu0
    %v372 = vadd.f32 0.0, %v371
    %373 = vmatmul.f32.gmra.mxu0 %v214
    %v374 = vpop.f32.mrf.mxu0
    %v375 = vadd.f32 0.0, %v374
    %376 = vmatmul.f32.gmra.mxu0 %v217
    %v377 = vpop.f32.mrf.mxu0
    %v378 = vadd.f32 0.0, %v377
    %379 = vmatmul.f32.gmra.mxu0 %v220
    %v380 = vpop.f32.mrf.mxu0
    %v381 = vadd.f32 0.0, %v380
    %382 = vmatmul.f32.gmra.mxu0 %v223
    %v383 = vpop.f32.mrf.mxu0
    %v384 = vadd.f32 0.0, %v383
    %385 = vmatmul.f32.gmra.mxu0 %v226
    %v386 = vpop.f32.mrf.mxu0
    %v387 = vadd.f32 0.0, %v386
    %388 = vmatmul.f32.gmra.mxu0 %v229
    %v389 = vpop.f32.mrf.mxu0
    %v390 = vadd.f32 0.0, %v389
    %391 = vmatmul.f32.gmra.mxu0 %v232
    %v392 = vpop.f32.mrf.mxu0
    %v393 = vadd.f32 0.0, %v392
    %394 = vmatmul.f32.gmra.mxu0 %v235
    %v395 = vpop.f32.mrf.mxu0
    %v396 = vadd.f32 0.0, %v395
    %397 = vmatmul.f32.gmra.mxu0 %v238
    %v398 = vpop.f32.mrf.mxu0
    %v399 = vadd.f32 0.0, %v398
    %400 = vdwg.mxu0
    %401 = vxpose.xlu0.b32.start [1/16] %v257, 128
    %402 = vxpose.xlu0.b32.cont [2/16] %v259, 128
    %403 = vxpose.xlu0.b32.cont [3/16] %v261, 128
    %404 = vxpose.xlu0.b32.cont [4/16] %v263, 128
    %405 = vxpose.xlu0.b32.cont [5/16] %v265, 128
    %406 = vxpose.xlu0.b32.cont [6/16] %v267, 128
    %407 = vxpose.xlu0.b32.cont [7/16] %v269, 128
    %408 = vxpose.xlu0.b32.cont [8/16] %v271, 128
    %409 = vxpose.xlu0.b32.cont [9/16] %v273, 128
    %410 = vxpose.xlu0.b32.cont [10/16] %v275, 128
    %411 = vxpose.xlu0.b32.cont [11/16] %v277, 128
    %412 = vxpose.xlu0.b32.cont [12/16] %v279, 128
    %413 = vxpose.xlu0.b32.cont [13/16] %v281, 128
    %414 = vxpose.xlu0.b32.cont [14/16] %v283, 128
    %415 = vxpose.xlu0.b32.cont [15/16] %v285, 128
    %416 = vxpose.xlu0.b32.end [16/16] %v287, 128
    %v417 = vpop.trf.xlu0
    %v418 = vpop.trf.xlu0
    %v419 = vpop.trf.xlu0
    %v420 = vpop.trf.xlu0
    %v421 = vpop.trf.xlu0
    %v422 = vpop.trf.xlu0
    %v423 = vpop.trf.xlu0
    %v424 = vpop.trf.xlu0
    %v425 = vpop.trf.xlu0
    %v426 = vpop.trf.xlu0
    %v427 = vpop.trf.xlu0
    %v428 = vpop.trf.xlu0
    %v429 = vpop.trf.xlu0
    %v430 = vpop.trf.xlu0
    %v431 = vpop.trf.xlu0
    %v432 = vpop.trf.xlu0
    %v433 = vperm.slane %v417, 0
    %v434 = vadd.f32 %v305, %v433
    %v435 = vadd.f32 %v307, %v433
    %v436 = vadd.f32 %v309, %v433
    %v437 = vadd.f32 %v311, %v433
    %v438 = vadd.f32 %v313, %v433
    %v439 = vadd.f32 %v315, %v433
    %v440 = vadd.f32 %v317, %v433
    %v441 = vadd.f32 %v319, %v433
    %v442 = vadd.f32 %v321, %v433
    %v443 = vadd.f32 %v323, %v433
    %v444 = vadd.f32 %v325, %v433
    %v445 = vadd.f32 %v327, %v433
    %v446 = vadd.f32 %v329, %v433
    %v447 = vadd.f32 %v331, %v433
    %v448 = vadd.f32 %v333, %v433
    %v449 = vadd.f32 %v335, %v433
    %v450 = vmul.f32 %v354, 2.0
    %v451 = vmul.f32 %v357, 2.0
    %v452 = vmul.f32 %v360, 2.0
    %v453 = vmul.f32 %v363, 2.0
    %v454 = vmul.f32 %v366, 2.0
    %v455 = vmul.f32 %v369, 2.0
    %v456 = vmul.f32 %v372, 2.0
    %v457 = vmul.f32 %v375, 2.0
    %v458 = vmul.f32 %v378, 2.0
    %v459 = vmul.f32 %v381, 2.0
    %v460 = vmul.f32 %v384, 2.0
    %v461 = vmul.f32 %v387, 2.0
    %v462 = vmul.f32 %v390, 2.0
    %v463 = vmul.f32 %v393, 2.0
    %v464 = vmul.f32 %v396, 2.0
    %v465 = vmul.f32 %v399, 2.0
    %v466 = vsub.f32 %v434, %v450
    %v467 = vsub.f32 %v435, %v451
    %v468 = vsub.f32 %v436, %v452
    %v469 = vsub.f32 %v437, %v453
    %v470 = vsub.f32 %v438, %v454
    %v471 = vsub.f32 %v439, %v455
    %v472 = vsub.f32 %v440, %v456
    %v473 = vsub.f32 %v441, %v457
    %v474 = vsub.f32 %v442, %v458
    %v475 = vsub.f32 %v443, %v459
    %v476 = vsub.f32 %v444, %v460
    %v477 = vsub.f32 %v445, %v461
    %v478 = vsub.f32 %v446, %v462
    %v479 = vsub.f32 %v447, %v463
    %v480 = vsub.f32 %v448, %v464
    %v481 = vsub.f32 %v449, %v465
    %v482 = vmax.f32 %v466, 0.0
    %v483 = vmax.f32 %v467, 0.0
    %v484 = vmax.f32 %v468, 0.0
    %v485 = vmax.f32 %v469, 0.0
    %v486 = vmax.f32 %v470, 0.0
    %v487 = vmax.f32 %v471, 0.0
    %v488 = vmax.f32 %v472, 0.0
    %v489 = vmax.f32 %v473, 0.0
    %v490 = vmax.f32 %v474, 0.0
    %v491 = vmax.f32 %v475, 0.0
    %v492 = vmax.f32 %v476, 0.0
    %v493 = vmax.f32 %v477, 0.0
    %v494 = vmax.f32 %v478, 0.0
    %v495 = vmax.f32 %v479, 0.0
    %v496 = vmax.f32 %v480, 0.0
    %v497 = vmax.f32 %v481, 0.0
    %v498 = vlaneseq
    %v499 = vand.u32 %v498, 127
    %vm500 = vcmp.lt.s32.totalorder %v499, 32
    %v501 = vsel %vm500, %v482, 1e+30
    %v502 = vsel %vm500, %v483, 1e+30
    %v503 = vsel %vm500, %v484, 1e+30
    %v504 = vsel %vm500, %v485, 1e+30
    %v505 = vsel %vm500, %v486, 1e+30
    %v506 = vsel %vm500, %v487, 1e+30
    %v507 = vsel %vm500, %v488, 1e+30
    %v508 = vsel %vm500, %v489, 1e+30
    %v509 = vsel %vm500, %v490, 1e+30
    %v510 = vsel %vm500, %v491, 1e+30
    %v511 = vsel %vm500, %v492, 1e+30
    %v512 = vsel %vm500, %v493, 1e+30
    %v513 = vsel %vm500, %v494, 1e+30
    %v514 = vsel %vm500, %v495, 1e+30
    %v515 = vsel %vm500, %v496, 1e+30
    %v516 = vsel %vm500, %v497, 1e+30
    loop: start=0, step=1, limit=20
    $region26: #{tpu_custom_call.1} parent=1 // loop_pre_header
      _
    $region27: #{tpu_custom_call.1} parent=1 // loop_header
      %s518 = sphi 0, %s522
      %p519 = scmp.ge.s32.totalorder %s518, 20
      %v523 = vphi %v501, %v587
      %v524 = vphi %v502, %v588
      %v525 = vphi %v503, %v589
      %v526 = vphi %v504, %v590
      %v527 = vphi %v505, %v591
      %v528 = vphi %v506, %v592
      %v529 = vphi %v507, %v593
      %v530 = vphi %v508, %v594
      %v531 = vphi %v509, %v595
      %v532 = vphi %v510, %v596
      %v533 = vphi %v511, %v597
      %v534 = vphi %v512, %v598
      %v535 = vphi %v513, %v599
      %v536 = vphi %v514, %v600
      %v537 = vphi %v515, %v601
      %v538 = vphi %v516, %v602
    $region28: #{tpu_custom_call.1} parent=1 // loop_header_branch
      %521 = sbr.rel (%p519) target = $region32
    $region29: #{tpu_custom_call.1} parent=1 // loop_body
      %539 = vmin.xlane.f32.xlu0 %v523
      %v540 = vpop.xlane.xlu0 %539
      %541 = vmin.xlane.f32.xlu0 %v524
      %v542 = vpop.xlane.xlu0 %541
      %543 = vmin.xlane.f32.xlu0 %v525
      %v544 = vpop.xlane.xlu0 %543
      %545 = vmin.xlane.f32.xlu0 %v526
      %v546 = vpop.xlane.xlu0 %545
      %547 = vmin.xlane.f32.xlu0 %v527
      %v548 = vpop.xlane.xlu0 %547
      %549 = vmin.xlane.f32.xlu0 %v528
      %v550 = vpop.xlane.xlu0 %549
      %551 = vmin.xlane.f32.xlu0 %v529
      %v552 = vpop.xlane.xlu0 %551
      %553 = vmin.xlane.f32.xlu0 %v530
      %v554 = vpop.xlane.xlu0 %553
      %555 = vmin.xlane.f32.xlu0 %v531
      %v556 = vpop.xlane.xlu0 %555
      %557 = vmin.xlane.f32.xlu0 %v532
      %v558 = vpop.xlane.xlu0 %557
      %559 = vmin.xlane.f32.xlu0 %v533
      %v560 = vpop.xlane.xlu0 %559
      %561 = vmin.xlane.f32.xlu0 %v534
      %v562 = vpop.xlane.xlu0 %561
      %563 = vmin.xlane.f32.xlu0 %v535
      %v564 = vpop.xlane.xlu0 %563
      %565 = vmin.xlane.f32.xlu0 %v536
      %v566 = vpop.xlane.xlu0 %565
      %567 = vmin.xlane.f32.xlu0 %v537
      %v568 = vpop.xlane.xlu0 %567
      %569 = vmin.xlane.f32.xlu0 %v538
      %v570 = vpop.xlane.xlu0 %569
      %vm571 = vcmp.eq.f32.partialorder %v523, %v540
      %vm572 = vcmp.eq.f32.partialorder %v524, %v542
      %vm573 = vcmp.eq.f32.partialorder %v525, %v544
      %vm574 = vcmp.eq.f32.partialorder %v526, %v546
      %vm575 = vcmp.eq.f32.partialorder %v527, %v548
      %vm576 = vcmp.eq.f32.partialorder %v528, %v550
      %vm577 = vcmp.eq.f32.partialorder %v529, %v552
      %vm578 = vcmp.eq.f32.partialorder %v530, %v554
      %vm579 = vcmp.eq.f32.partialorder %v531, %v556
      %vm580 = vcmp.eq.f32.partialorder %v532, %v558
      %vm581 = vcmp.eq.f32.partialorder %v533, %v560
      %vm582 = vcmp.eq.f32.partialorder %v534, %v562
      %vm583 = vcmp.eq.f32.partialorder %v535, %v564
      %vm584 = vcmp.eq.f32.partialorder %v536, %v566
      %vm585 = vcmp.eq.f32.partialorder %v537, %v568
      %vm586 = vcmp.eq.f32.partialorder %v538, %v570
      %v587 = vsel %vm571, 1e+30, %v523
      %v588 = vsel %vm572, 1e+30, %v524
      %v589 = vsel %vm573, 1e+30, %v525
      %v590 = vsel %vm574, 1e+30, %v526
      %v591 = vsel %vm575, 1e+30, %v527
      %v592 = vsel %vm576, 1e+30, %v528
      %v593 = vsel %vm577, 1e+30, %v529
      %v594 = vsel %vm578, 1e+30, %v530
      %v595 = vsel %vm579, 1e+30, %v531
      %v596 = vsel %vm580, 1e+30, %v532
      %v597 = vsel %vm581, 1e+30, %v533
      %v598 = vsel %vm582, 1e+30, %v534
      %v599 = vsel %vm583, 1e+30, %v535
      %v600 = vsel %vm584, 1e+30, %v536
      %v601 = vsel %vm585, 1e+30, %v537
      %v602 = vsel %vm586, 1e+30, %v538
    $region30: #{tpu_custom_call.1} parent=1 // loop_footer
      %s522 = sadd.s32 1, %s518
    $region31: #{tpu_custom_call.1} parent=1 // loop_footer_branch
      %517 = sbr.rel target = $region27
    $region32: #{tpu_custom_call.1} parent=1 // loop_exit
      _
    %603 = vmin.xlane.f32.xlu0 %v523
    %v604 = vpop.xlane.xlu0 %603
    %605 = vmin.xlane.f32.xlu0 %v524
    %v606 = vpop.xlane.xlu0 %605
    %607 = vmin.xlane.f32.xlu0 %v525
    %v608 = vpop.xlane.xlu0 %607
    %609 = vmin.xlane.f32.xlu0 %v526
    %v610 = vpop.xlane.xlu0 %609
    %611 = vmin.xlane.f32.xlu0 %v527
    %v612 = vpop.xlane.xlu0 %611
    %613 = vmin.xlane.f32.xlu0 %v528
    %v614 = vpop.xlane.xlu0 %613
    %615 = vmin.xlane.f32.xlu0 %v529
    %v616 = vpop.xlane.xlu0 %615
    %617 = vmin.xlane.f32.xlu0 %v530
    %v618 = vpop.xlane.xlu0 %617
    %619 = vmin.xlane.f32.xlu0 %v531
    %v620 = vpop.xlane.xlu0 %619
    %621 = vmin.xlane.f32.xlu0 %v532
    %v622 = vpop.xlane.xlu0 %621
    %623 = vmin.xlane.f32.xlu0 %v533
    %v624 = vpop.xlane.xlu0 %623
    %625 = vmin.xlane.f32.xlu0 %v534
    %v626 = vpop.xlane.xlu0 %625
    %627 = vmin.xlane.f32.xlu0 %v535
    %v628 = vpop.xlane.xlu0 %627
    %629 = vmin.xlane.f32.xlu0 %v536
    %v630 = vpop.xlane.xlu0 %629
    %631 = vmin.xlane.f32.xlu0 %v537
    %v632 = vpop.xlane.xlu0 %631
    %633 = vmin.xlane.f32.xlu0 %v538
    %v634 = vpop.xlane.xlu0 %633
    %v635 = vmax.f32 %v604, 1e-30
    %v636 = vmax.f32 %v606, 1e-30
    %v637 = vmax.f32 %v608, 1e-30
    %v638 = vmax.f32 %v610, 1e-30
    %v639 = vmax.f32 %v612, 1e-30
    %v640 = vmax.f32 %v614, 1e-30
    %v641 = vmax.f32 %v616, 1e-30
    %v642 = vmax.f32 %v618, 1e-30
    %v643 = vmax.f32 %v620, 1e-30
    %v644 = vmax.f32 %v622, 1e-30
    %v645 = vmax.f32 %v624, 1e-30
    %v646 = vmax.f32 %v626, 1e-30
    %v647 = vmax.f32 %v628, 1e-30
    %v648 = vmax.f32 %v630, 1e-30
    %v649 = vmax.f32 %v632, 1e-30
    %v650 = vmax.f32 %v634, 1e-30
    %v651 = vrsqrt.pop %v635
    %v652 = vmul.f32 %v651, %v635
    %v653 = vmul.f32 %v652, %v651
    %v654 = vmul.f32 0.5, %v653
    %v655 = vsub.f32 1.5, %v654
    %v656 = vmul.f32 %v651, %v655
    %v657 = vmul.f32 %v635, %v656
    %vm658 = vcmp.eq.f32.partialorder %v635, inf
    %v659 = vsel %vm658, %v635, %v657
    %vm660 = vcmp.eq.f32.partialorder %v635, 0.0
    %v661 = vand.u32 %v635, 2147483648
    %v662 = vsel %vm660, %v661, %v659
    %v663 = vrsqrt.pop %v636
    %v664 = vmul.f32 %v663, %v636
    %v665 = vmul.f32 %v664, %v663
    %v666 = vmul.f32 0.5, %v665
    %v667 = vsub.f32 1.5, %v666
    %v668 = vmul.f32 %v663, %v667
    %v669 = vmul.f32 %v636, %v668
    %vm670 = vcmp.eq.f32.partialorder %v636, inf
    %v671 = vsel %vm670, %v636, %v669
    %vm672 = vcmp.eq.f32.partialorder %v636, 0.0
    %v673 = vand.u32 %v636, 2147483648
    %v674 = vsel %vm672, %v673, %v671
    %v675 = vrsqrt.pop %v637
    %v676 = vmul.f32 %v675, %v637
    %v677 = vmul.f32 %v676, %v675
    %v678 = vmul.f32 0.5, %v677
    %v679 = vsub.f32 1.5, %v678
    %v680 = vmul.f32 %v675, %v679
    %v681 = vmul.f32 %v637, %v680
    %vm682 = vcmp.eq.f32.partialorder %v637, inf
    %v683 = vsel %vm682, %v637, %v681
    %vm684 = vcmp.eq.f32.partialorder %v637, 0.0
    %v685 = vand.u32 %v637, 2147483648
    %v686 = vsel %vm684, %v685, %v683
    %v687 = vrsqrt.pop %v638
    %v688 = vmul.f32 %v687, %v638
    %v689 = vmul.f32 %v688, %v687
    %v690 = vmul.f32 0.5, %v689
    %v691 = vsub.f32 1.5, %v690
    %v692 = vmul.f32 %v687, %v691
    %v693 = vmul.f32 %v638, %v692
    %vm694 = vcmp.eq.f32.partialorder %v638, inf
    %v695 = vsel %vm694, %v638, %v693
    %vm696 = vcmp.eq.f32.partialorder %v638, 0.0
    %v697 = vand.u32 %v638, 2147483648
    %v698 = vsel %vm696, %v697, %v695
    %v699 = vrsqrt.pop %v639
    %v700 = vmul.f32 %v699, %v639
    %v701 = vmul.f32 %v700, %v699
    %v702 = vmul.f32 0.5, %v701
    %v703 = vsub.f32 1.5, %v702
    %v704 = vmul.f32 %v699, %v703
    %v705 = vmul.f32 %v639, %v704
    %vm706 = vcmp.eq.f32.partialorder %v639, inf
    %v707 = vsel %vm706, %v639, %v705
    %vm708 = vcmp.eq.f32.partialorder %v639, 0.0
    %v709 = vand.u32 %v639, 2147483648
    %v710 = vsel %vm708, %v709, %v707
    %v711 = vrsqrt.pop %v640
    %v712 = vmul.f32 %v711, %v640
    %v713 = vmul.f32 %v712, %v711
    %v714 = vmul.f32 0.5, %v713
    %v715 = vsub.f32 1.5, %v714
    %v716 = vmul.f32 %v711, %v715
    %v717 = vmul.f32 %v640, %v716
    %vm718 = vcmp.eq.f32.partialorder %v640, inf
    %v719 = vsel %vm718, %v640, %v717
    %vm720 = vcmp.eq.f32.partialorder %v640, 0.0
    %v721 = vand.u32 %v640, 2147483648
    %v722 = vsel %vm720, %v721, %v719
    %v723 = vrsqrt.pop %v641
    %v724 = vmul.f32 %v723, %v641
    %v725 = vmul.f32 %v724, %v723
    %v726 = vmul.f32 0.5, %v725
    %v727 = vsub.f32 1.5, %v726
    %v728 = vmul.f32 %v723, %v727
    %v729 = vmul.f32 %v641, %v728
    %vm730 = vcmp.eq.f32.partialorder %v641, inf
    %v731 = vsel %vm730, %v641, %v729
    %vm732 = vcmp.eq.f32.partialorder %v641, 0.0
    %v733 = vand.u32 %v641, 2147483648
    %v734 = vsel %vm732, %v733, %v731
    %v735 = vrsqrt.pop %v642
    %v736 = vmul.f32 %v735, %v642
    %v737 = vmul.f32 %v736, %v735
    %v738 = vmul.f32 0.5, %v737
    %v739 = vsub.f32 1.5, %v738
    %v740 = vmul.f32 %v735, %v739
    %v741 = vmul.f32 %v642, %v740
    %vm742 = vcmp.eq.f32.partialorder %v642, inf
    %v743 = vsel %vm742, %v642, %v741
    %vm744 = vcmp.eq.f32.partialorder %v642, 0.0
    %v745 = vand.u32 %v642, 2147483648
    %v746 = vsel %vm744, %v745, %v743
    %v747 = vrsqrt.pop %v643
    %v748 = vmul.f32 %v747, %v643
    %v749 = vmul.f32 %v748, %v747
    %v750 = vmul.f32 0.5, %v749
    %v751 = vsub.f32 1.5, %v750
    %v752 = vmul.f32 %v747, %v751
    %v753 = vmul.f32 %v643, %v752
    %vm754 = vcmp.eq.f32.partialorder %v643, inf
    %v755 = vsel %vm754, %v643, %v753
    %vm756 = vcmp.eq.f32.partialorder %v643, 0.0
    %v757 = vand.u32 %v643, 2147483648
    %v758 = vsel %vm756, %v757, %v755
    %v759 = vrsqrt.pop %v644
    %v760 = vmul.f32 %v759, %v644
    %v761 = vmul.f32 %v760, %v759
    %v762 = vmul.f32 0.5, %v761
    %v763 = vsub.f32 1.5, %v762
    %v764 = vmul.f32 %v759, %v763
    %v765 = vmul.f32 %v644, %v764
    %vm766 = vcmp.eq.f32.partialorder %v644, inf
    %v767 = vsel %vm766, %v644, %v765
    %vm768 = vcmp.eq.f32.partialorder %v644, 0.0
    %v769 = vand.u32 %v644, 2147483648
    %v770 = vsel %vm768, %v769, %v767
    %v771 = vrsqrt.pop %v645
    %v772 = vmul.f32 %v771, %v645
    %v773 = vmul.f32 %v772, %v771
    %v774 = vmul.f32 0.5, %v773
    %v775 = vsub.f32 1.5, %v774
    %v776 = vmul.f32 %v771, %v775
    %v777 = vmul.f32 %v645, %v776
    %vm778 = vcmp.eq.f32.partialorder %v645, inf
    %v779 = vsel %vm778, %v645, %v777
    %vm780 = vcmp.eq.f32.partialorder %v645, 0.0
    %v781 = vand.u32 %v645, 2147483648
    %v782 = vsel %vm780, %v781, %v779
    %v783 = vrsqrt.pop %v646
    %v784 = vmul.f32 %v783, %v646
    %v785 = vmul.f32 %v784, %v783
    %v786 = vmul.f32 0.5, %v785
    %v787 = vsub.f32 1.5, %v786
    %v788 = vmul.f32 %v783, %v787
    %v789 = vmul.f32 %v646, %v788
    %vm790 = vcmp.eq.f32.partialorder %v646, inf
    %v791 = vsel %vm790, %v646, %v789
    %vm792 = vcmp.eq.f32.partialorder %v646, 0.0
    %v793 = vand.u32 %v646, 2147483648
    %v794 = vsel %vm792, %v793, %v791
    %v795 = vrsqrt.pop %v647
    %v796 = vmul.f32 %v795, %v647
    %v797 = vmul.f32 %v796, %v795
    %v798 = vmul.f32 0.5, %v797
    %v799 = vsub.f32 1.5, %v798
    %v800 = vmul.f32 %v795, %v799
    %v801 = vmul.f32 %v647, %v800
    %vm802 = vcmp.eq.f32.partialorder %v647, inf
    %v803 = vsel %vm802, %v647, %v801
    %vm804 = vcmp.eq.f32.partialorder %v647, 0.0
    %v805 = vand.u32 %v647, 2147483648
    %v806 = vsel %vm804, %v805, %v803
    %v807 = vrsqrt.pop %v648
    %v808 = vmul.f32 %v807, %v648
    %v809 = vmul.f32 %v808, %v807
    %v810 = vmul.f32 0.5, %v809
    %v811 = vsub.f32 1.5, %v810
    %v812 = vmul.f32 %v807, %v811
    %v813 = vmul.f32 %v648, %v812
    %vm814 = vcmp.eq.f32.partialorder %v648, inf
    %v815 = vsel %vm814, %v648, %v813
    %vm816 = vcmp.eq.f32.partialorder %v648, 0.0
    %v817 = vand.u32 %v648, 2147483648
    %v818 = vsel %vm816, %v817, %v815
    %v819 = vrsqrt.pop %v649
    %v820 = vmul.f32 %v819, %v649
    %v821 = vmul.f32 %v820, %v819
    %v822 = vmul.f32 0.5, %v821
    %v823 = vsub.f32 1.5, %v822
    %v824 = vmul.f32 %v819, %v823
    %v825 = vmul.f32 %v649, %v824
    %vm826 = vcmp.eq.f32.partialorder %v649, inf
    %v827 = vsel %vm826, %v649, %v825
    %vm828 = vcmp.eq.f32.partialorder %v649, 0.0
    %v829 = vand.u32 %v649, 2147483648
    %v830 = vsel %vm828, %v829, %v827
    %v831 = vrsqrt.pop %v650
    %v832 = vmul.f32 %v831, %v650
    %v833 = vmul.f32 %v832, %v831
    %v834 = vmul.f32 0.5, %v833
    %v835 = vsub.f32 1.5, %v834
    %v836 = vmul.f32 %v831, %v835
    %v837 = vmul.f32 %v650, %v836
    %vm838 = vcmp.eq.f32.partialorder %v650, inf
    %v839 = vsel %vm838, %v650, %v837
    %vm840 = vcmp.eq.f32.partialorder %v650, 0.0
    %v841 = vand.u32 %v650, 2147483648
    %v842 = vsel %vm840, %v841, %v839
    %v843 = vrcp.pop %v662
    %v844 = vmul.f32 %v662, %v843
    %v845 = vsub.f32 1.0, %v844
    %v846 = vmul.f32 %v843, %v845
    %v847 = vadd.f32 %v843, %v846
    %vm848 = vweird.f32 %v662
    %vm849 = vweird.f32 %v843
    %vm850 = vmor %vm848, %vm849
    %v851 = vsel %vm850, %v843, %v847
    %v852 = vand.u32 2147483647, %v662
    %vm853 = vcmp.eq.f32.partialorder %v852, 8.507059e+37
    %v854 = vand.u32 %v662, 2147483648
    %v855 = vor.u32 1.1754944e-38, %v854
    %v856 = vsel %vm853, %v855, %v851
    %v857 = vmul.f32 1.0, %v856
    %v858 = vrcp.pop %v674
    %v859 = vmul.f32 %v674, %v858
    %v860 = vsub.f32 1.0, %v859
    %v861 = vmul.f32 %v858, %v860
    %v862 = vadd.f32 %v858, %v861
    %vm863 = vweird.f32 %v674
    %vm864 = vweird.f32 %v858
    %vm865 = vmor %vm863, %vm864
    %v866 = vsel %vm865, %v858, %v862
    %v867 = vand.u32 2147483647, %v674
    %vm868 = vcmp.eq.f32.partialorder %v867, 8.507059e+37
    %v869 = vand.u32 %v674, 2147483648
    %v870 = vor.u32 1.1754944e-38, %v869
    %v871 = vsel %vm868, %v870, %v866
    %v872 = vmul.f32 1.0, %v871
    %v873 = vrcp.pop %v686
    %v874 = vmul.f32 %v686, %v873
    %v875 = vsub.f32 1.0, %v874
    %v876 = vmul.f32 %v873, %v875
    %v877 = vadd.f32 %v873, %v876
    %vm878 = vweird.f32 %v686
    %vm879 = vweird.f32 %v873
    %vm880 = vmor %vm878, %vm879
    %v881 = vsel %vm880, %v873, %v877
    %v882 = vand.u32 2147483647, %v686
    %vm883 = vcmp.eq.f32.partialorder %v882, 8.507059e+37
    %v884 = vand.u32 %v686, 2147483648
    %v885 = vor.u32 1.1754944e-38, %v884
    %v886 = vsel %vm883, %v885, %v881
    %v887 = vmul.f32 1.0, %v886
    %v888 = vrcp.pop %v698
    %v889 = vmul.f32 %v698, %v888
    %v890 = vsub.f32 1.0, %v889
    %v891 = vmul.f32 %v888, %v890
    %v892 = vadd.f32 %v888, %v891
    %vm893 = vweird.f32 %v698
    %vm894 = vweird.f32 %v888
    %vm895 = vmor %vm893, %vm894
    %v896 = vsel %vm895, %v888, %v892
    %v897 = vand.u32 2147483647, %v698
    %vm898 = vcmp.eq.f32.partialorder %v897, 8.507059e+37
    %v899 = vand.u32 %v698, 2147483648
    %v900 = vor.u32 1.1754944e-38, %v899
    %v901 = vsel %vm898, %v900, %v896
    %v902 = vmul.f32 1.0, %v901
    %v903 = vrcp.pop %v710
    %v904 = vmul.f32 %v710, %v903
    %v905 = vsub.f32 1.0, %v904
    %v906 = vmul.f32 %v903, %v905
    %v907 = vadd.f32 %v903, %v906
    %vm908 = vweird.f32 %v710
    %vm909 = vweird.f32 %v903
    %vm910 = vmor %vm908, %vm909
    %v911 = vsel %vm910, %v903, %v907
    %v912 = vand.u32 2147483647, %v710
    %vm913 = vcmp.eq.f32.partialorder %v912, 8.507059e+37
    %v914 = vand.u32 %v710, 2147483648
    %v915 = vor.u32 1.1754944e-38, %v914
    %v916 = vsel %vm913, %v915, %v911
    %v917 = vmul.f32 1.0, %v916
    %v918 = vrcp.pop %v722
    %v919 = vmul.f32 %v722, %v918
    %v920 = vsub.f32 1.0, %v919
    %v921 = vmul.f32 %v918, %v920
    %v922 = vadd.f32 %v918, %v921
    %vm923 = vweird.f32 %v722
    %vm924 = vweird.f32 %v918
    %vm925 = vmor %vm923, %vm924
    %v926 = vsel %vm925, %v918, %v922
    %v927 = vand.u32 2147483647, %v722
    %vm928 = vcmp.eq.f32.partialorder %v927, 8.507059e+37
    %v929 = vand.u32 %v722, 2147483648
    %v930 = vor.u32 1.1754944e-38, %v929
    %v931 = vsel %vm928, %v930, %v926
    %v932 = vmul.f32 1.0, %v931
    %v933 = vrcp.pop %v734
    %v934 = vmul.f32 %v734, %v933
    %v935 = vsub.f32 1.0, %v934
    %v936 = vmul.f32 %v933, %v935
    %v937 = vadd.f32 %v933, %v936
    %vm938 = vweird.f32 %v734
    %vm939 = vweird.f32 %v933
    %vm940 = vmor %vm938, %vm939
    %v941 = vsel %vm940, %v933, %v937
    %v942 = vand.u32 2147483647, %v734
    %vm943 = vcmp.eq.f32.partialorder %v942, 8.507059e+37
    %v944 = vand.u32 %v734, 2147483648
    %v945 = vor.u32 1.1754944e-38, %v944
    %v946 = vsel %vm943, %v945, %v941
    %v947 = vmul.f32 1.0, %v946
    %v948 = vrcp.pop %v746
    %v949 = vmul.f32 %v746, %v948
    %v950 = vsub.f32 1.0, %v949
    %v951 = vmul.f32 %v948, %v950
    %v952 = vadd.f32 %v948, %v951
    %vm953 = vweird.f32 %v746
    %vm954 = vweird.f32 %v948
    %vm955 = vmor %vm953, %vm954
    %v956 = vsel %vm955, %v948, %v952
    %v957 = vand.u32 2147483647, %v746
    %vm958 = vcmp.eq.f32.partialorder %v957, 8.507059e+37
    %v959 = vand.u32 %v746, 2147483648
    %v960 = vor.u32 1.1754944e-38, %v959
    %v961 = vsel %vm958, %v960, %v956
    %v962 = vmul.f32 1.0, %v961
    %v963 = vrcp.pop %v758
    %v964 = vmul.f32 %v758, %v963
    %v965 = vsub.f32 1.0, %v964
    %v966 = vmul.f32 %v963, %v965
    %v967 = vadd.f32 %v963, %v966
    %vm968 = vweird.f32 %v758
    %vm969 = vweird.f32 %v963
    %vm970 = vmor %vm968, %vm969
    %v971 = vsel %vm970, %v963, %v967
    %v972 = vand.u32 2147483647, %v758
    %vm973 = vcmp.eq.f32.partialorder %v972, 8.507059e+37
    %v974 = vand.u32 %v758, 2147483648
    %v975 = vor.u32 1.1754944e-38, %v974
    %v976 = vsel %vm973, %v975, %v971
    %v977 = vmul.f32 1.0, %v976
    %v978 = vrcp.pop %v770
    %v979 = vmul.f32 %v770, %v978
    %v980 = vsub.f32 1.0, %v979
    %v981 = vmul.f32 %v978, %v980
    %v982 = vadd.f32 %v978, %v981
    %vm983 = vweird.f32 %v770
    %vm984 = vweird.f32 %v978
    %vm985 = vmor %vm983, %vm984
    %v986 = vsel %vm985, %v978, %v982
    %v987 = vand.u32 2147483647, %v770
    %vm988 = vcmp.eq.f32.partialorder %v987, 8.507059e+37
    %v989 = vand.u32 %v770, 2147483648
    %v990 = vor.u32 1.1754944e-38, %v989
    %v991 = vsel %vm988, %v990, %v986
    %v992 = vmul.f32 1.0, %v991
    %v993 = vrcp.pop %v782
    %v994 = vmul.f32 %v782, %v993
    %v995 = vsub.f32 1.0, %v994
    %v996 = vmul.f32 %v993, %v995
    %v997 = vadd.f32 %v993, %v996
    %vm998 = vweird.f32 %v782
    %vm999 = vweird.f32 %v993
    %vm1000 = vmor %vm998, %vm999
    %v1001 = vsel %vm1000, %v993, %v997
    %v1002 = vand.u32 2147483647, %v782
    %vm1003 = vcmp.eq.f32.partialorder %v1002, 8.507059e+37
    %v1004 = vand.u32 %v782, 2147483648
    %v1005 = vor.u32 1.1754944e-38, %v1004
    %v1006 = vsel %vm1003, %v1005, %v1001
    %v1007 = vmul.f32 1.0, %v1006
    %v1008 = vrcp.pop %v794
    %v1009 = vmul.f32 %v794, %v1008
    %v1010 = vsub.f32 1.0, %v1009
    %v1011 = vmul.f32 %v1008, %v1010
    %v1012 = vadd.f32 %v1008, %v1011
    %vm1013 = vweird.f32 %v794
    %vm1014 = vweird.f32 %v1008
    %vm1015 = vmor %vm1013, %vm1014
    %v1016 = vsel %vm1015, %v1008, %v1012
    %v1017 = vand.u32 2147483647, %v794
    %vm1018 = vcmp.eq.f32.partialorder %v1017, 8.507059e+37
    %v1019 = vand.u32 %v794, 2147483648
    %v1020 = vor.u32 1.1754944e-38, %v1019
    %v1021 = vsel %vm1018, %v1020, %v1016
    %v1022 = vmul.f32 1.0, %v1021
    %v1023 = vrcp.pop %v806
    %v1024 = vmul.f32 %v806, %v1023
    %v1025 = vsub.f32 1.0, %v1024
    %v1026 = vmul.f32 %v1023, %v1025
    %v1027 = vadd.f32 %v1023, %v1026
    %vm1028 = vweird.f32 %v806
    %vm1029 = vweird.f32 %v1023
    %vm1030 = vmor %vm1028, %vm1029
    %v1031 = vsel %vm1030, %v1023, %v1027
    %v1032 = vand.u32 2147483647, %v806
    %vm1033 = vcmp.eq.f32.partialorder %v1032, 8.507059e+37
    %v1034 = vand.u32 %v806, 2147483648
    %v1035 = vor.u32 1.1754944e-38, %v1034
    %v1036 = vsel %vm1033, %v1035, %v1031
    %v1037 = vmul.f32 1.0, %v1036
    %v1038 = vrcp.pop %v818
    %v1039 = vmul.f32 %v818, %v1038
    %v1040 = vsub.f32 1.0, %v1039
    %v1041 = vmul.f32 %v1038, %v1040
    %v1042 = vadd.f32 %v1038, %v1041
    %vm1043 = vweird.f32 %v818
    %vm1044 = vweird.f32 %v1038
    %vm1045 = vmor %vm1043, %vm1044
    %v1046 = vsel %vm1045, %v1038, %v1042
    %v1047 = vand.u32 2147483647, %v818
    %vm1048 = vcmp.eq.f32.partialorder %v1047, 8.507059e+37
    %v1049 = vand.u32 %v818, 2147483648
    %v1050 = vor.u32 1.1754944e-38, %v1049
    %v1051 = vsel %vm1048, %v1050, %v1046
    %v1052 = vmul.f32 1.0, %v1051
    %v1053 = vrcp.pop %v830
    %v1054 = vmul.f32 %v830, %v1053
    %v1055 = vsub.f32 1.0, %v1054
    %v1056 = vmul.f32 %v1053, %v1055
    %v1057 = vadd.f32 %v1053, %v1056
    %vm1058 = vweird.f32 %v830
    %vm1059 = vweird.f32 %v1053
    %vm1060 = vmor %vm1058, %vm1059
    %v1061 = vsel %vm1060, %v1053, %v1057
    %v1062 = vand.u32 2147483647, %v830
    %vm1063 = vcmp.eq.f32.partialorder %v1062, 8.507059e+37
    %v1064 = vand.u32 %v830, 2147483648
    %v1065 = vor.u32 1.1754944e-38, %v1064
    %v1066 = vsel %vm1063, %v1065, %v1061
    %v1067 = vmul.f32 1.0, %v1066
    %v1068 = vrcp.pop %v842
    %v1069 = vmul.f32 %v842, %v1068
    %v1070 = vsub.f32 1.0, %v1069
    %v1071 = vmul.f32 %v1068, %v1070
    %v1072 = vadd.f32 %v1068, %v1071
    %vm1073 = vweird.f32 %v842
    %vm1074 = vweird.f32 %v1068
    %vm1075 = vmor %vm1073, %vm1074
    %v1076 = vsel %vm1075, %v1068, %v1072
    %v1077 = vand.u32 2147483647, %v842
    %vm1078 = vcmp.eq.f32.partialorder %v1077, 8.507059e+37
    %v1079 = vand.u32 %v842, 2147483648
    %v1080 = vor.u32 1.1754944e-38, %v1079
    %v1081 = vsel %vm1078, %v1080, %v1076
    %v1082 = vmul.f32 1.0, %v1081
    %v1083 = vrsqrt.pop %v501
    %v1084 = vmul.f32 %v1083, %v501
    %v1085 = vmul.f32 %v1084, %v1083
    %v1086 = vmul.f32 0.5, %v1085
    %v1087 = vsub.f32 1.5, %v1086
    %v1088 = vmul.f32 %v1083, %v1087
    %v1089 = vmul.f32 %v501, %v1088
    %vm1090 = vcmp.eq.f32.partialorder %v501, inf
    %v1091 = vsel %vm1090, %v501, %v1089
    %vm1092 = vcmp.eq.f32.partialorder %v501, 0.0
    %v1093 = vand.u32 %v501, 2147483648
    %v1094 = vsel %vm1092, %v1093, %v1091
    %v1095 = vrsqrt.pop %v502
    %v1096 = vmul.f32 %v1095, %v502
    %v1097 = vmul.f32 %v1096, %v1095
    %v1098 = vmul.f32 0.5, %v1097
    %v1099 = vsub.f32 1.5, %v1098
    %v1100 = vmul.f32 %v1095, %v1099
    %v1101 = vmul.f32 %v502, %v1100
    %vm1102 = vcmp.eq.f32.partialorder %v502, inf
    %v1103 = vsel %vm1102, %v502, %v1101
    %vm1104 = vcmp.eq.f32.partialorder %v502, 0.0
    %v1105 = vand.u32 %v502, 2147483648
    %v1106 = vsel %vm1104, %v1105, %v1103
    %v1107 = vrsqrt.pop %v503
    %v1108 = vmul.f32 %v1107, %v503
    %v1109 = vmul.f32 %v1108, %v1107
    %v1110 = vmul.f32 0.5, %v1109
    %v1111 = vsub.f32 1.5, %v1110
    %v1112 = vmul.f32 %v1107, %v1111
    %v1113 = vmul.f32 %v503, %v1112
    %vm1114 = vcmp.eq.f32.partialorder %v503, inf
    %v1115 = vsel %vm1114, %v503, %v1113
    %vm1116 = vcmp.eq.f32.partialorder %v503, 0.0
    %v1117 = vand.u32 %v503, 2147483648
    %v1118 = vsel %vm1116, %v1117, %v1115
    %v1119 = vrsqrt.pop %v504
    %v1120 = vmul.f32 %v1119, %v504
    %v1121 = vmul.f32 %v1120, %v1119
    %v1122 = vmul.f32 0.5, %v1121
    %v1123 = vsub.f32 1.5, %v1122
    %v1124 = vmul.f32 %v1119, %v1123
    %v1125 = vmul.f32 %v504, %v1124
    %vm1126 = vcmp.eq.f32.partialorder %v504, inf
    %v1127 = vsel %vm1126, %v504, %v1125
    %vm1128 = vcmp.eq.f32.partialorder %v504, 0.0
    %v1129 = vand.u32 %v504, 2147483648
    %v1130 = vsel %vm1128, %v1129, %v1127
    %v1131 = vrsqrt.pop %v505
    %v1132 = vmul.f32 %v1131, %v505
    %v1133 = vmul.f32 %v1132, %v1131
    %v1134 = vmul.f32 0.5, %v1133
    %v1135 = vsub.f32 1.5, %v1134
    %v1136 = vmul.f32 %v1131, %v1135
    %v1137 = vmul.f32 %v505, %v1136
    %vm1138 = vcmp.eq.f32.partialorder %v505, inf
    %v1139 = vsel %vm1138, %v505, %v1137
    %vm1140 = vcmp.eq.f32.partialorder %v505, 0.0
    %v1141 = vand.u32 %v505, 2147483648
    %v1142 = vsel %vm1140, %v1141, %v1139
    %v1143 = vrsqrt.pop %v506
    %v1144 = vmul.f32 %v1143, %v506
    %v1145 = vmul.f32 %v1144, %v1143
    %v1146 = vmul.f32 0.5, %v1145
    %v1147 = vsub.f32 1.5, %v1146
    %v1148 = vmul.f32 %v1143, %v1147
    %v1149 = vmul.f32 %v506, %v1148
    %vm1150 = vcmp.eq.f32.partialorder %v506, inf
    %v1151 = vsel %vm1150, %v506, %v1149
    %vm1152 = vcmp.eq.f32.partialorder %v506, 0.0
    %v1153 = vand.u32 %v506, 2147483648
    %v1154 = vsel %vm1152, %v1153, %v1151
    %v1155 = vrsqrt.pop %v507
    %v1156 = vmul.f32 %v1155, %v507
    %v1157 = vmul.f32 %v1156, %v1155
    %v1158 = vmul.f32 0.5, %v1157
    %v1159 = vsub.f32 1.5, %v1158
    %v1160 = vmul.f32 %v1155, %v1159
    %v1161 = vmul.f32 %v507, %v1160
    %vm1162 = vcmp.eq.f32.partialorder %v507, inf
    %v1163 = vsel %vm1162, %v507, %v1161
    %vm1164 = vcmp.eq.f32.partialorder %v507, 0.0
    %v1165 = vand.u32 %v507, 2147483648
    %v1166 = vsel %vm1164, %v1165, %v1163
    %v1167 = vrsqrt.pop %v508
    %v1168 = vmul.f32 %v1167, %v508
    %v1169 = vmul.f32 %v1168, %v1167
    %v1170 = vmul.f32 0.5, %v1169
    %v1171 = vsub.f32 1.5, %v1170
    %v1172 = vmul.f32 %v1167, %v1171
    %v1173 = vmul.f32 %v508, %v1172
    %vm1174 = vcmp.eq.f32.partialorder %v508, inf
    %v1175 = vsel %vm1174, %v508, %v1173
    %vm1176 = vcmp.eq.f32.partialorder %v508, 0.0
    %v1177 = vand.u32 %v508, 2147483648
    %v1178 = vsel %vm1176, %v1177, %v1175
    %v1179 = vrsqrt.pop %v509
    %v1180 = vmul.f32 %v1179, %v509
    %v1181 = vmul.f32 %v1180, %v1179
    %v1182 = vmul.f32 0.5, %v1181
    %v1183 = vsub.f32 1.5, %v1182
    %v1184 = vmul.f32 %v1179, %v1183
    %v1185 = vmul.f32 %v509, %v1184
    %vm1186 = vcmp.eq.f32.partialorder %v509, inf
    %v1187 = vsel %vm1186, %v509, %v1185
    %vm1188 = vcmp.eq.f32.partialorder %v509, 0.0
    %v1189 = vand.u32 %v509, 2147483648
    %v1190 = vsel %vm1188, %v1189, %v1187
    %v1191 = vrsqrt.pop %v510
    %v1192 = vmul.f32 %v1191, %v510
    %v1193 = vmul.f32 %v1192, %v1191
    %v1194 = vmul.f32 0.5, %v1193
    %v1195 = vsub.f32 1.5, %v1194
    %v1196 = vmul.f32 %v1191, %v1195
    %v1197 = vmul.f32 %v510, %v1196
    %vm1198 = vcmp.eq.f32.partialorder %v510, inf
    %v1199 = vsel %vm1198, %v510, %v1197
    %vm1200 = vcmp.eq.f32.partialorder %v510, 0.0
    %v1201 = vand.u32 %v510, 2147483648
    %v1202 = vsel %vm1200, %v1201, %v1199
    %v1203 = vrsqrt.pop %v511
    %v1204 = vmul.f32 %v1203, %v511
    %v1205 = vmul.f32 %v1204, %v1203
    %v1206 = vmul.f32 0.5, %v1205
    %v1207 = vsub.f32 1.5, %v1206
    %v1208 = vmul.f32 %v1203, %v1207
    %v1209 = vmul.f32 %v511, %v1208
    %vm1210 = vcmp.eq.f32.partialorder %v511, inf
    %v1211 = vsel %vm1210, %v511, %v1209
    %vm1212 = vcmp.eq.f32.partialorder %v511, 0.0
    %v1213 = vand.u32 %v511, 2147483648
    %v1214 = vsel %vm1212, %v1213, %v1211
    %v1215 = vrsqrt.pop %v512
    %v1216 = vmul.f32 %v1215, %v512
    %v1217 = vmul.f32 %v1216, %v1215
    %v1218 = vmul.f32 0.5, %v1217
    %v1219 = vsub.f32 1.5, %v1218
    %v1220 = vmul.f32 %v1215, %v1219
    %v1221 = vmul.f32 %v512, %v1220
    %vm1222 = vcmp.eq.f32.partialorder %v512, inf
    %v1223 = vsel %vm1222, %v512, %v1221
    %vm1224 = vcmp.eq.f32.partialorder %v512, 0.0
    %v1225 = vand.u32 %v512, 2147483648
    %v1226 = vsel %vm1224, %v1225, %v1223
    %v1227 = vrsqrt.pop %v513
    %v1228 = vmul.f32 %v1227, %v513
    %v1229 = vmul.f32 %v1228, %v1227
    %v1230 = vmul.f32 0.5, %v1229
    %v1231 = vsub.f32 1.5, %v1230
    %v1232 = vmul.f32 %v1227, %v1231
    %v1233 = vmul.f32 %v513, %v1232
    %vm1234 = vcmp.eq.f32.partialorder %v513, inf
    %v1235 = vsel %vm1234, %v513, %v1233
    %vm1236 = vcmp.eq.f32.partialorder %v513, 0.0
    %v1237 = vand.u32 %v513, 2147483648
    %v1238 = vsel %vm1236, %v1237, %v1235
    %v1239 = vrsqrt.pop %v514
    %v1240 = vmul.f32 %v1239, %v514
    %v1241 = vmul.f32 %v1240, %v1239
    %v1242 = vmul.f32 0.5, %v1241
    %v1243 = vsub.f32 1.5, %v1242
    %v1244 = vmul.f32 %v1239, %v1243
    %v1245 = vmul.f32 %v514, %v1244
    %vm1246 = vcmp.eq.f32.partialorder %v514, inf
    %v1247 = vsel %vm1246, %v514, %v1245
    %vm1248 = vcmp.eq.f32.partialorder %v514, 0.0
    %v1249 = vand.u32 %v514, 2147483648
    %v1250 = vsel %vm1248, %v1249, %v1247
    %v1251 = vrsqrt.pop %v515
    %v1252 = vmul.f32 %v1251, %v515
    %v1253 = vmul.f32 %v1252, %v1251
    %v1254 = vmul.f32 0.5, %v1253
    %v1255 = vsub.f32 1.5, %v1254
    %v1256 = vmul.f32 %v1251, %v1255
    %v1257 = vmul.f32 %v515, %v1256
    %vm1258 = vcmp.eq.f32.partialorder %v515, inf
    %v1259 = vsel %vm1258, %v515, %v1257
    %vm1260 = vcmp.eq.f32.partialorder %v515, 0.0
    %v1261 = vand.u32 %v515, 2147483648
    %v1262 = vsel %vm1260, %v1261, %v1259
    %v1263 = vrsqrt.pop %v516
    %v1264 = vmul.f32 %v1263, %v516
    %v1265 = vmul.f32 %v1264, %v1263
    %v1266 = vmul.f32 0.5, %v1265
    %v1267 = vsub.f32 1.5, %v1266
    %v1268 = vmul.f32 %v1263, %v1267
    %v1269 = vmul.f32 %v516, %v1268
    %vm1270 = vcmp.eq.f32.partialorder %v516, inf
    %v1271 = vsel %vm1270, %v516, %v1269
    %vm1272 = vcmp.eq.f32.partialorder %v516, 0.0
    %v1273 = vand.u32 %v516, 2147483648
    %v1274 = vsel %vm1272, %v1273, %v1271
    %v1275 = vmul.f32 %v1094, %v857
    %v1276 = vmul.f32 %v1106, %v872
    %v1277 = vmul.f32 %v1118, %v887
    %v1278 = vmul.f32 %v1130, %v902
    %v1279 = vmul.f32 %v1142, %v917
    %v1280 = vmul.f32 %v1154, %v932
    %v1281 = vmul.f32 %v1166, %v947
    %v1282 = vmul.f32 %v1178, %v962
    %v1283 = vmul.f32 %v1190, %v977
    %v1284 = vmul.f32 %v1202, %v992
    %v1285 = vmul.f32 %v1214, %v1007
    %v1286 = vmul.f32 %v1226, %v1022
    %v1287 = vmul.f32 %v1238, %v1037
    %v1288 = vmul.f32 %v1250, %v1052
    %v1289 = vmul.f32 %v1262, %v1067
    %v1290 = vmul.f32 %v1274, %v1082
    %v1291 = vsub.f32 1.0, %v1275
    %v1292 = vsub.f32 1.0, %v1276
    %v1293 = vsub.f32 1.0, %v1277
    %v1294 = vsub.f32 1.0, %v1278
    %v1295 = vsub.f32 1.0, %v1279
    %v1296 = vsub.f32 1.0, %v1280
    %v1297 = vsub.f32 1.0, %v1281
    %v1298 = vsub.f32 1.0, %v1282
    %v1299 = vsub.f32 1.0, %v1283
    %v1300 = vsub.f32 1.0, %v1284
    %v1301 = vsub.f32 1.0, %v1285
    %v1302 = vsub.f32 1.0, %v1286
    %v1303 = vsub.f32 1.0, %v1287
    %v1304 = vsub.f32 1.0, %v1288
    %v1305 = vsub.f32 1.0, %v1289
    %v1306 = vsub.f32 1.0, %v1290
    %v1307 = vmax.f32 %v1291, 0.0
    %v1308 = vmax.f32 %v1292, 0.0
    %v1309 = vmax.f32 %v1293, 0.0
    %v1310 = vmax.f32 %v1294, 0.0
    %v1311 = vmax.f32 %v1295, 0.0
    %v1312 = vmax.f32 %v1296, 0.0
    %v1313 = vmax.f32 %v1297, 0.0
    %v1314 = vmax.f32 %v1298, 0.0
    %v1315 = vmax.f32 %v1299, 0.0
    %v1316 = vmax.f32 %v1300, 0.0
    %v1317 = vmax.f32 %v1301, 0.0
    %v1318 = vmax.f32 %v1302, 0.0
    %v1319 = vmax.f32 %v1303, 0.0
    %v1320 = vmax.f32 %v1304, 0.0
    %v1321 = vmax.f32 %v1305, 0.0
    %v1322 = vmax.f32 %v1306, 0.0
    %1323 = vadd.xlane.f32.xlu0 %v1307
    %v1324 = vpop.xlane.xlu0 %1323
    %1325 = vadd.xlane.f32.xlu0 %v1308
    %v1326 = vpop.xlane.xlu0 %1325
    %1327 = vadd.xlane.f32.xlu0 %v1309
    %v1328 = vpop.xlane.xlu0 %1327
    %1329 = vadd.xlane.f32.xlu0 %v1310
    %v1330 = vpop.xlane.xlu0 %1329
    %1331 = vadd.xlane.f32.xlu0 %v1311
    %v1332 = vpop.xlane.xlu0 %1331
    %1333 = vadd.xlane.f32.xlu0 %v1312
    %v1334 = vpop.xlane.xlu0 %1333
    %1335 = vadd.xlane.f32.xlu0 %v1313
    %v1336 = vpop.xlane.xlu0 %1335
    %1337 = vadd.xlane.f32.xlu0 %v1314
    %v1338 = vpop.xlane.xlu0 %1337
    %1339 = vadd.xlane.f32.xlu0 %v1315
    %v1340 = vpop.xlane.xlu0 %1339
    %1341 = vadd.xlane.f32.xlu0 %v1316
    %v1342 = vpop.xlane.xlu0 %1341
    %1343 = vadd.xlane.f32.xlu0 %v1317
    %v1344 = vpop.xlane.xlu0 %1343
    %1345 = vadd.xlane.f32.xlu0 %v1318
    %v1346 = vpop.xlane.xlu0 %1345
    %1347 = vadd.xlane.f32.xlu0 %v1319
    %v1348 = vpop.xlane.xlu0 %1347
    %1349 = vadd.xlane.f32.xlu0 %v1320
    %v1350 = vpop.xlane.xlu0 %1349
    %1351 = vadd.xlane.f32.xlu0 %v1321
    %v1352 = vpop.xlane.xlu0 %1351
    %1353 = vadd.xlane.f32.xlu0 %v1322
    %v1354 = vpop.xlane.xlu0 %1353
    %v1355 = vmax.f32 %v1324, 1e-30
    %v1356 = vmax.f32 %v1326, 1e-30
    %v1357 = vmax.f32 %v1328, 1e-30
    %v1358 = vmax.f32 %v1330, 1e-30
    %v1359 = vmax.f32 %v1332, 1e-30
    %v1360 = vmax.f32 %v1334, 1e-30
    %v1361 = vmax.f32 %v1336, 1e-30
    %v1362 = vmax.f32 %v1338, 1e-30
    %v1363 = vmax.f32 %v1340, 1e-30
    %v1364 = vmax.f32 %v1342, 1e-30
    %v1365 = vmax.f32 %v1344, 1e-30
    %v1366 = vmax.f32 %v1346, 1e-30
    %v1367 = vmax.f32 %v1348, 1e-30
    %v1368 = vmax.f32 %v1350, 1e-30
    %v1369 = vmax.f32 %v1352, 1e-30
    %v1370 = vmax.f32 %v1354, 1e-30
    %1371 = vmatpush.msra.mxu0 %v77
    %1372 = vmatpush.msra.mxu0 %v76
    %1373 = vmatpush.msra.mxu0 %v75
    %1374 = vmatpush.msra.mxu0 %v74
    %1375 = vmatpush.msra.mxu0 %v73
    %1376 = vmatpush.msra.mxu0 %v72
    %1377 = vmatpush.msra.mxu0 %v71
    %1378 = vmatpush.msra.mxu0 %v70
    %1379 = vmatpush.msra.mxu0 %v69
    %1380 = vmatpush.msra.mxu0 %v68
    %1381 = vmatpush.msra.mxu0 %v67
    %1382 = vmatpush.msra.mxu0 %v66
    %1383 = vmatpush.msra.mxu0 %v65
    %1384 = vmatpush.msra.mxu0 %v64
    %1385 = vmatpush.msra.mxu0 %v63
    %1386 = vmatpush.msra.mxu0 %v62
    %1387 = vmatmul.f32.gmra.mxu0 %v1307
    %v1388 = vpop.f32.mrf.mxu0
    %v1389 = vadd.f32 0.0, %v1388
    %1390 = vmatmul.f32.gmra.mxu0 %v1308
    %v1391 = vpop.f32.mrf.mxu0
    %v1392 = vadd.f32 0.0, %v1391
    %1393 = vmatmul.f32.gmra.mxu0 %v1309
    %v1394 = vpop.f32.mrf.mxu0
    %v1395 = vadd.f32 0.0, %v1394
    %1396 = vmatmul.f32.gmra.mxu0 %v1310
    %v1397 = vpop.f32.mrf.mxu0
    %v1398 = vadd.f32 0.0, %v1397
    %1399 = vmatmul.f32.gmra.mxu0 %v1311
    %v1400 = vpop.f32.mrf.mxu0
    %v1401 = vadd.f32 0.0, %v1400
    %1402 = vmatmul.f32.gmra.mxu0 %v1312
    %v1403 = vpop.f32.mrf.mxu0
    %v1404 = vadd.f32 0.0, %v1403
    %1405 = vmatmul.f32.gmra.mxu0 %v1313
    %v1406 = vpop.f32.mrf.mxu0
    %v1407 = vadd.f32 0.0, %v1406
    %1408 = vmatmul.f32.gmra.mxu0 %v1314
    %v1409 = vpop.f32.mrf.mxu0
    %v1410 = vadd.f32 0.0, %v1409
    %1411 = vmatmul.f32.gmra.mxu0 %v1315
    %v1412 = vpop.f32.mrf.mxu0
    %v1413 = vadd.f32 0.0, %v1412
    %1414 = vmatmul.f32.gmra.mxu0 %v1316
    %v1415 = vpop.f32.mrf.mxu0
    %v1416 = vadd.f32 0.0, %v1415
    %1417 = vmatmul.f32.gmra.mxu0 %v1317
    %v1418 = vpop.f32.mrf.mxu0
    %v1419 = vadd.f32 0.0, %v1418
    %1420 = vmatmul.f32.gmra.mxu0 %v1318
    %v1421 = vpop.f32.mrf.mxu0
    %v1422 = vadd.f32 0.0, %v1421
    %1423 = vmatmul.f32.gmra.mxu0 %v1319
    %v1424 = vpop.f32.mrf.mxu0
    %v1425 = vadd.f32 0.0, %v1424
    %1426 = vmatmul.f32.gmra.mxu0 %v1320
    %v1427 = vpop.f32.mrf.mxu0
    %v1428 = vadd.f32 0.0, %v1427
    %1429 = vmatmul.f32.gmra.mxu0 %v1321
    %v1430 = vpop.f32.mrf.mxu0
    %v1431 = vadd.f32 0.0, %v1430
    %1432 = vmatmul.f32.gmra.mxu0 %v1322
    %v1433 = vpop.f32.mrf.mxu0
    %v1434 = vadd.f32 0.0, %v1433
    %1435 = vdwg.mxu0
    %v1436 = vrcp.pop %v1355
    %v1437 = vmul.f32 %v1355, %v1436
    %v1438 = vsub.f32 1.0, %v1437
    %v1439 = vmul.f32 %v1436, %v1438
    %v1440 = vadd.f32 %v1436, %v1439
    %vm1441 = vweird.f32 %v1355
    %vm1442 = vweird.f32 %v1436
    %vm1443 = vmor %vm1441, %vm1442
    %v1444 = vsel %vm1443, %v1436, %v1440
    %v1445 = vand.u32 2147483647, %v1355
    %vm1446 = vcmp.eq.f32.partialorder %v1445, 8.507059e+37
    %v1447 = vand.u32 %v1355, 2147483648
    %v1448 = vor.u32 1.1754944e-38, %v1447
    %v1449 = vsel %vm1446, %v1448, %v1444
    %v1450 = vmul.f32 1.0, %v1449
    %v1451 = vrcp.pop %v1356
    %v1452 = vmul.f32 %v1356, %v1451
    %v1453 = vsub.f32 1.0, %v1452
    %v1454 = vmul.f32 %v1451, %v1453
    %v1455 = vadd.f32 %v1451, %v1454
    %vm1456 = vweird.f32 %v1356
    %vm1457 = vweird.f32 %v1451
    %vm1458 = vmor %vm1456, %vm1457
    %v1459 = vsel %vm1458, %v1451, %v1455
    %v1460 = vand.u32 2147483647, %v1356
    %vm1461 = vcmp.eq.f32.partialorder %v1460, 8.507059e+37
    %v1462 = vand.u32 %v1356, 2147483648
    %v1463 = vor.u32 1.1754944e-38, %v1462
    %v1464 = vsel %vm1461, %v1463, %v1459
    %v1465 = vmul.f32 1.0, %v1464
    %v1466 = vrcp.pop %v1357
    %v1467 = vmul.f32 %v1357, %v1466
    %v1468 = vsub.f32 1.0, %v1467
    %v1469 = vmul.f32 %v1466, %v1468
    %v1470 = vadd.f32 %v1466, %v1469
    %vm1471 = vweird.f32 %v1357
    %vm1472 = vweird.f32 %v1466
    %vm1473 = vmor %vm1471, %vm1472
    %v1474 = vsel %vm1473, %v1466, %v1470
    %v1475 = vand.u32 2147483647, %v1357
    %vm1476 = vcmp.eq.f32.partialorder %v1475, 8.507059e+37
    %v1477 = vand.u32 %v1357, 2147483648
    %v1478 = vor.u32 1.1754944e-38, %v1477
    %v1479 = vsel %vm1476, %v1478, %v1474
    %v1480 = vmul.f32 1.0, %v1479
    %v1481 = vrcp.pop %v1358
    %v1482 = vmul.f32 %v1358, %v1481
    %v1483 = vsub.f32 1.0, %v1482
    %v1484 = vmul.f32 %v1481, %v1483
    %v1485 = vadd.f32 %v1481, %v1484
    %vm1486 = vweird.f32 %v1358
    %vm1487 = vweird.f32 %v1481
    %vm1488 = vmor %vm1486, %vm1487
    %v1489 = vsel %vm1488, %v1481, %v1485
    %v1490 = vand.u32 2147483647, %v1358
    %vm1491 = vcmp.eq.f32.partialorder %v1490, 8.507059e+37
    %v1492 = vand.u32 %v1358, 2147483648
    %v1493 = vor.u32 1.1754944e-38, %v1492
    %v1494 = vsel %vm1491, %v1493, %v1489
    %v1495 = vmul.f32 1.0, %v1494
    %v1496 = vrcp.pop %v1359
    %v1497 = vmul.f32 %v1359, %v1496
    %v1498 = vsub.f32 1.0, %v1497
    %v1499 = vmul.f32 %v1496, %v1498
    %v1500 = vadd.f32 %v1496, %v1499
    %vm1501 = vweird.f32 %v1359
    %vm1502 = vweird.f32 %v1496
    %vm1503 = vmor %vm1501, %vm1502
    %v1504 = vsel %vm1503, %v1496, %v1500
    %v1505 = vand.u32 2147483647, %v1359
    %vm1506 = vcmp.eq.f32.partialorder %v1505, 8.507059e+37
    %v1507 = vand.u32 %v1359, 2147483648
    %v1508 = vor.u32 1.1754944e-38, %v1507
    %v1509 = vsel %vm1506, %v1508, %v1504
    %v1510 = vmul.f32 1.0, %v1509
    %v1511 = vrcp.pop %v1360
    %v1512 = vmul.f32 %v1360, %v1511
    %v1513 = vsub.f32 1.0, %v1512
    %v1514 = vmul.f32 %v1511, %v1513
    %v1515 = vadd.f32 %v1511, %v1514
    %vm1516 = vweird.f32 %v1360
    %vm1517 = vweird.f32 %v1511
    %vm1518 = vmor %vm1516, %vm1517
    %v1519 = vsel %vm1518, %v1511, %v1515
    %v1520 = vand.u32 2147483647, %v1360
    %vm1521 = vcmp.eq.f32.partialorder %v1520, 8.507059e+37
    %v1522 = vand.u32 %v1360, 2147483648
    %v1523 = vor.u32 1.1754944e-38, %v1522
    %v1524 = vsel %vm1521, %v1523, %v1519
    %v1525 = vmul.f32 1.0, %v1524
    %v1526 = vrcp.pop %v1361
    %v1527 = vmul.f32 %v1361, %v1526
    %v1528 = vsub.f32 1.0, %v1527
    %v1529 = vmul.f32 %v1526, %v1528
    %v1530 = vadd.f32 %v1526, %v1529
    %vm1531 = vweird.f32 %v1361
    %vm1532 = vweird.f32 %v1526
    %vm1533 = vmor %vm1531, %vm1532
    %v1534 = vsel %vm1533, %v1526, %v1530
    %v1535 = vand.u32 2147483647, %v1361
    %vm1536 = vcmp.eq.f32.partialorder %v1535, 8.507059e+37
    %v1537 = vand.u32 %v1361, 2147483648
    %v1538 = vor.u32 1.1754944e-38, %v1537
    %v1539 = vsel %vm1536, %v1538, %v1534
    %v1540 = vmul.f32 1.0, %v1539
    %v1541 = vrcp.pop %v1362
    %v1542 = vmul.f32 %v1362, %v1541
    %v1543 = vsub.f32 1.0, %v1542
    %v1544 = vmul.f32 %v1541, %v1543
    %v1545 = vadd.f32 %v1541, %v1544
    %vm1546 = vweird.f32 %v1362
    %vm1547 = vweird.f32 %v1541
    %vm1548 = vmor %vm1546, %vm1547
    %v1549 = vsel %vm1548, %v1541, %v1545
    %v1550 = vand.u32 2147483647, %v1362
    %vm1551 = vcmp.eq.f32.partialorder %v1550, 8.507059e+37
    %v1552 = vand.u32 %v1362, 2147483648
    %v1553 = vor.u32 1.1754944e-38, %v1552
    %v1554 = vsel %vm1551, %v1553, %v1549
    %v1555 = vmul.f32 1.0, %v1554
    %v1556 = vrcp.pop %v1363
    %v1557 = vmul.f32 %v1363, %v1556
    %v1558 = vsub.f32 1.0, %v1557
    %v1559 = vmul.f32 %v1556, %v1558
    %v1560 = vadd.f32 %v1556, %v1559
    %vm1561 = vweird.f32 %v1363
    %vm1562 = vweird.f32 %v1556
    %vm1563 = vmor %vm1561, %vm1562
    %v1564 = vsel %vm1563, %v1556, %v1560
    %v1565 = vand.u32 2147483647, %v1363
    %vm1566 = vcmp.eq.f32.partialorder %v1565, 8.507059e+37
    %v1567 = vand.u32 %v1363, 2147483648
    %v1568 = vor.u32 1.1754944e-38, %v1567
    %v1569 = vsel %vm1566, %v1568, %v1564
    %v1570 = vmul.f32 1.0, %v1569
    %v1571 = vrcp.pop %v1364
    %v1572 = vmul.f32 %v1364, %v1571
    %v1573 = vsub.f32 1.0, %v1572
    %v1574 = vmul.f32 %v1571, %v1573
    %v1575 = vadd.f32 %v1571, %v1574
    %vm1576 = vweird.f32 %v1364
    %vm1577 = vweird.f32 %v1571
    %vm1578 = vmor %vm1576, %vm1577
    %v1579 = vsel %vm1578, %v1571, %v1575
    %v1580 = vand.u32 2147483647, %v1364
    %vm1581 = vcmp.eq.f32.partialorder %v1580, 8.507059e+37
    %v1582 = vand.u32 %v1364, 2147483648
    %v1583 = vor.u32 1.1754944e-38, %v1582
    %v1584 = vsel %vm1581, %v1583, %v1579
    %v1585 = vmul.f32 1.0, %v1584
    %v1586 = vrcp.pop %v1365
    %v1587 = vmul.f32 %v1365, %v1586
    %v1588 = vsub.f32 1.0, %v1587
    %v1589 = vmul.f32 %v1586, %v1588
    %v1590 = vadd.f32 %v1586, %v1589
    %vm1591 = vweird.f32 %v1365
    %vm1592 = vweird.f32 %v1586
    %vm1593 = vmor %vm1591, %vm1592
    %v1594 = vsel %vm1593, %v1586, %v1590
    %v1595 = vand.u32 2147483647, %v1365
    %vm1596 = vcmp.eq.f32.partialorder %v1595, 8.507059e+37
    %v1597 = vand.u32 %v1365, 2147483648
    %v1598 = vor.u32 1.1754944e-38, %v1597
    %v1599 = vsel %vm1596, %v1598, %v1594
    %v1600 = vmul.f32 1.0, %v1599
    %v1601 = vrcp.pop %v1366
    %v1602 = vmul.f32 %v1366, %v1601
    %v1603 = vsub.f32 1.0, %v1602
    %v1604 = vmul.f32 %v1601, %v1603
    %v1605 = vadd.f32 %v1601, %v1604
    %vm1606 = vweird.f32 %v1366
    %vm1607 = vweird.f32 %v1601
    %vm1608 = vmor %vm1606, %vm1607
    %v1609 = vsel %vm1608, %v1601, %v1605
    %v1610 = vand.u32 2147483647, %v1366
    %vm1611 = vcmp.eq.f32.partialorder %v1610, 8.507059e+37
    %v1612 = vand.u32 %v1366, 2147483648
    %v1613 = vor.u32 1.1754944e-38, %v1612
    %v1614 = vsel %vm1611, %v1613, %v1609
    %v1615 = vmul.f32 1.0, %v1614
    %v1616 = vrcp.pop %v1367
    %v1617 = vmul.f32 %v1367, %v1616
    %v1618 = vsub.f32 1.0, %v1617
    %v1619 = vmul.f32 %v1616, %v1618
    %v1620 = vadd.f32 %v1616, %v1619
    %vm1621 = vweird.f32 %v1367
    %vm1622 = vweird.f32 %v1616
    %vm1623 = vmor %vm1621, %vm1622
    %v1624 = vsel %vm1623, %v1616, %v1620
    %v1625 = vand.u32 2147483647, %v1367
    %vm1626 = vcmp.eq.f32.partialorder %v1625, 8.507059e+37
    %v1627 = vand.u32 %v1367, 2147483648
    %v1628 = vor.u32 1.1754944e-38, %v1627
    %v1629 = vsel %vm1626, %v1628, %v1624
    %v1630 = vmul.f32 1.0, %v1629
    %v1631 = vrcp.pop %v1368
    %v1632 = vmul.f32 %v1368, %v1631
    %v1633 = vsub.f32 1.0, %v1632
    %v1634 = vmul.f32 %v1631, %v1633
    %v1635 = vadd.f32 %v1631, %v1634
    %vm1636 = vweird.f32 %v1368
    %vm1637 = vweird.f32 %v1631
    %vm1638 = vmor %vm1636, %vm1637
    %v1639 = vsel %vm1638, %v1631, %v1635
    %v1640 = vand.u32 2147483647, %v1368
    %vm1641 = vcmp.eq.f32.partialorder %v1640, 8.507059e+37
    %v1642 = vand.u32 %v1368, 2147483648
    %v1643 = vor.u32 1.1754944e-38, %v1642
    %v1644 = vsel %vm1641, %v1643, %v1639
    %v1645 = vmul.f32 1.0, %v1644
    %v1646 = vrcp.pop %v1369
    %v1647 = vmul.f32 %v1369, %v1646
    %v1648 = vsub.f32 1.0, %v1647
    %v1649 = vmul.f32 %v1646, %v1648
    %v1650 = vadd.f32 %v1646, %v1649
    %vm1651 = vweird.f32 %v1369
    %vm1652 = vweird.f32 %v1646
    %vm1653 = vmor %vm1651, %vm1652
    %v1654 = vsel %vm1653, %v1646, %v1650
    %v1655 = vand.u32 2147483647, %v1369
    %vm1656 = vcmp.eq.f32.partialorder %v1655, 8.507059e+37
    %v1657 = vand.u32 %v1369, 2147483648
    %v1658 = vor.u32 1.1754944e-38, %v1657
    %v1659 = vsel %vm1656, %v1658, %v1654
    %v1660 = vmul.f32 1.0, %v1659
    %v1661 = vrcp.pop %v1370
    %v1662 = vmul.f32 %v1370, %v1661
    %v1663 = vsub.f32 1.0, %v1662
    %v1664 = vmul.f32 %v1661, %v1663
    %v1665 = vadd.f32 %v1661, %v1664
    %vm1666 = vweird.f32 %v1370
    %vm1667 = vweird.f32 %v1661
    %vm1668 = vmor %vm1666, %vm1667
    %v1669 = vsel %vm1668, %v1661, %v1665
    %v1670 = vand.u32 2147483647, %v1370
    %vm1671 = vcmp.eq.f32.partialorder %v1670, 8.507059e+37
    %v1672 = vand.u32 %v1370, 2147483648
    %v1673 = vor.u32 1.1754944e-38, %v1672
    %v1674 = vsel %vm1671, %v1673, %v1669
    %v1675 = vmul.f32 1.0, %v1674
    %v1676 = vmul.f32 %v1389, %v1450
    %v1677 = vmul.f32 %v1392, %v1465
    %v1678 = vmul.f32 %v1395, %v1480
    %v1679 = vmul.f32 %v1398, %v1495
    %v1680 = vmul.f32 %v1401, %v1510
    %v1681 = vmul.f32 %v1404, %v1525
    %v1682 = vmul.f32 %v1407, %v1540
    %v1683 = vmul.f32 %v1410, %v1555
    %v1684 = vmul.f32 %v1413, %v1570
    %v1685 = vmul.f32 %v1416, %v1585
    %v1686 = vmul.f32 %v1419, %v1600
    %v1687 = vmul.f32 %v1422, %v1615
    %v1688 = vmul.f32 %v1425, %v1630
    %v1689 = vmul.f32 %v1428, %v1645
    %v1690 = vmul.f32 %v1431, %v1660
    %v1691 = vmul.f32 %v1434, %v1675
    %1692 = vst [vmem:[#allocation8] sm:$0xff] %v1676
    %1693 = vst [vmem:[#allocation8 + $0x8] sm:$0xff] %v1677
    %1694 = vst [vmem:[#allocation8 + $0x10] sm:$0xff] %v1678
    %1695 = vst [vmem:[#allocation8 + $0x18] sm:$0xff] %v1679
    %1696 = vst [vmem:[#allocation8 + $0x20] sm:$0xff] %v1680
    %1697 = vst [vmem:[#allocation8 + $0x28] sm:$0xff] %v1681
    %1698 = vst [vmem:[#allocation8 + $0x30] sm:$0xff] %v1682
    %1699 = vst [vmem:[#allocation8 + $0x38] sm:$0xff] %v1683
    %1700 = vst [vmem:[#allocation8 + $0x40] sm:$0xff] %v1684
    %1701 = vst [vmem:[#allocation8 + $0x48] sm:$0xff] %v1685
    %1702 = vst [vmem:[#allocation8 + $0x50] sm:$0xff] %v1686
    %1703 = vst [vmem:[#allocation8 + $0x58] sm:$0xff] %v1687
    %1704 = vst [vmem:[#allocation8 + $0x60] sm:$0xff] %v1688
    %1705 = vst [vmem:[#allocation8 + $0x68] sm:$0xff] %v1689
    %1706 = vst [vmem:[#allocation8 + $0x70] sm:$0xff] %v1690
    %1707 = vst [vmem:[#allocation8 + $0x78] sm:$0xff] %v1691
    // Predicated region
    $region33: #{tpu_custom_call.1} parent=1 // pred_check
      _
    $region34: #{tpu_custom_call.1} parent=1 // pred_check_branch
      %1709 = sbr.rel (0) target = $region36
    $region35: #{tpu_custom_call.1} parent=1 // pred_region
      %1711 = vsyncadd [#allocation4], 0
      %s1712 = sshll.u32 [#allocation8], 4
      %s1713 = int_to_ptr.vmem [resolvable:$true] %s1712
      %s1714 = sshll.u32 %s3, 4
      %s1715 = int_to_ptr.hbm [resolvable:$true] %s1714
      %1720 = dma.vmem_to_hbm [thread:$0]  %s1713, 2048, %s1715, [#allocation4], 128, 128, 8
    $region36: #{tpu_custom_call.1} parent=1 // pred_fallthru
      _
    // Predicated region
    $region37: #{tpu_custom_call.1} parent=1 // pred_check
      _
    $region38: #{tpu_custom_call.1} parent=1 // pred_check_branch
      %1722 = sbr.rel (0) target = $region40
    $region39: #{tpu_custom_call.1} parent=1 // pred_region
      %1724 = dma.done [#allocation4], 2048
    $region40: #{tpu_custom_call.1} parent=1 // pred_fallthru
      _
    %1725 = vsyncpa [#allocation3], 1
    %1726 = vsyncpa [#allocation6], 1
    %1727 = vsyncpa [#allocation4], 1

</llo_original>
